<compile_context>
chip_gen: v7x
topology: tpu7x:2x2x1
jax: 0.10.0
libtpu: 0.0.40
codegen_flags: <defaults>
</compile_context>

<pallas_src>
import itertools

import jax
import jax.numpy as jnp
from jax.experimental import pallas as pl
from jax.experimental.pallas import tpu as pltpu

_LN_EPS = 1e-5


def _round_up(v, m):
    return (v + m - 1) // m * m


def _vmem_capacity_bytes():
    try:
        info = pltpu.get_tpu_info()
        cap = getattr(info, "vmem_capacity_bytes", None)
        if cap:
            return int(cap)
    except Exception:
        pass
    return 64 * 1024 * 1024          # conservative fallback (v7x per-TC VMEM)


_VMEM_CAP = _vmem_capacity_bytes()
_VMEM_BUDGET = int(_VMEM_CAP * 0.45)  # tile-selection budget
_VMEM_LIMIT = int(_VMEM_CAP * 0.75)   # requested scoped VMEM


def _merge_ln_linear_kernel(x00_ref, x01_ref, x10_ref, x11_ref,
                            w_ref, cb_ref, o_ref):
    """Fused patch-merge + LayerNorm + bias-free Linear for one token tile.

    x??_ref: (th, tw, 2c)  parity piece (i, j); the w-parity k is packed into
                           the last dim as [k=0 channels | k=1 channels], so the
                           8c merged channels are the 4 pieces' 2c channels in
                           torch.cat's (i, j, k) order.
    w_ref:   (8c, c2)      gamma-folded weight  W' = gamma[:, None] * W
    cb_ref:  (2, c2)       row 0 = colsum(W'),  row 1 = beta @ W
    o_ref:   (th, tw, c2)
    """
    pieces = (x00_ref, x01_ref, x10_ref, x11_ref)
    th, tw, c2in = x00_ref.shape
    c2out = o_ref.shape[-1]
    inv_n = 1.0 / (4 * c2in)          # 1 / (8*dim)

    # Resident weight: piece p uses rows [p*2c, (p+1)*2c) of W'.
    w_parts = [w_ref[p * c2in:(p + 1) * c2in, :] for p in range(4)]
    colsum = cb_ref[0:1, :]           # (1, c2)
    bias = cb_ref[1:2, :]             # (1, c2)

    def rows_fn(xs):
        # xs: 4 values of shape (rows, 2c); returns (rows, c2) in out dtype.
        s1 = s2 = y = None
        for xp, wp in zip(xs, w_parts):
            xf = xp.astype(jnp.float32)
            r1 = jnp.sum(xf, axis=-1, keepdims=True)
            r2 = jnp.sum(xf * xf, axis=-1, keepdims=True)
            xmm = xp if xp.dtype == wp.dtype else xp.astype(wp.dtype)
            yp = jnp.dot(xmm, wp, preferred_element_type=jnp.float32)
            s1 = r1 if s1 is None else s1 + r1
            s2 = r2 if s2 is None else s2 + r2
            y = yp if y is None else y + yp
        mean = s1 * inv_n
        var = s2 * inv_n - mean * mean
        inv_std = jax.lax.rsqrt(var + _LN_EPS)
        # ((x - mean) * inv_std) @ W' + beta @ W
        #   == (x @ W' - mean * colsum(W')) * inv_std + bias
        return ((y - mean * colsum) * inv_std + bias).astype(o_ref.dtype)

    if th == 1 or tw % 8 == 0:
        # Merging (th, tw) -> rows is a layout no-op here (tw % 8 == 0 or th==1),
        # so one big flattened matmul per piece.
        xs = tuple(r[...].reshape(th * tw, c2in) for r in pieces)
        o_ref[...] = rows_fn(xs).reshape(th, tw, c2out)
    else:
        # Small, statically-unrolled per-h-row loop avoids any non-trivial
        # in-kernel relayout when tw is not sublane-aligned.
        for r in range(th):
            o_ref[r] = rows_fn(tuple(p[r] for p in pieces))


@jax.jit
def patch_merging_v2(x, gamma, beta, weight):
    """
    x:      (b, d, h, w, c)   channel-last activations
    gamma:  (8*c,)            LayerNorm weight
    beta:   (8*c,)            LayerNorm bias
    weight: (8*c, 2*c)        Linear weight stored (in, out): y = x @ weight
    returns (b, ceil(d/2), ceil(h/2), ceil(w/2), 2*c) in x.dtype
    """
    assert x.ndim == 5, "only the spatial_dims=3 path is implemented"
    # TODO(synk): spatial_dims=2 (4-D input) branch of the module is not implemented.
    b, d, h, w, c = x.shape
    c8 = 8 * c
    c2 = weight.shape[1]
    c2in = 2 * c
    out_dtype = x.dtype

    # ---- parity pad (matches F.pad in the torch module) ----
    pd, ph, pw = d % 2, h % 2, w % 2
    if pd or ph or pw:
        x = jnp.pad(x, ((0, 0), (0, pd), (0, ph), (0, pw), (0, 0)))
    d2, h2, w2 = (d + pd) // 2, (h + ph) // 2, (w + pw) // 2

    # Free row-major view (no transpose copy): w-parity folded into channels,
    # d/h parities exposed as size-2 axes pinned per piece by the BlockSpecs.
    xv = x.reshape(b, d2, 2, h2, 2, w2, c2in)

    # ---- fold the LayerNorm affine into the matmul (tiny, done once) ----
    w32 = weight.astype(jnp.float32)
    w_folded = gamma.astype(jnp.float32)[:, None] * w32            # (8c, 2c)
    bias = beta.astype(jnp.float32) @ w32                          # (2c,)
    mm_dtype = jnp.bfloat16 if out_dtype == jnp.bfloat16 else jnp.float32
    w_folded = w_folded.astype(mm_dtype)
    colsum = jnp.sum(w_folded.astype(jnp.float32), axis=0)         # (2c,)
    cb = jnp.stack([colsum, bias]).astype(jnp.float32)             # (2, 2c)

    # ---- tile selection (static, shape-driven) ----
    x_item = jnp.dtype(out_dtype).itemsize
    w_item = jnp.dtype(mm_dtype).itemsize
    tw = w2 if w2 <= 512 else 512                 # full extent or multiple of 8
    rows_max = 2048 if _VMEM_CAP >= 96 * 1024 * 1024 else 512
    per_row = (tw * c8 * 2 * x_item               # 4 pieces, double-buffered
               + tw * c2 * 2 * x_item             # output, double-buffered
               + tw * (c8 + c2) * 4)              # f32 in-kernel intermediates
    fixed = 2 * c8 * c2 * w_item + 2 * 2 * c2 * 4
    th = max(1, min(h2, (_VMEM_BUDGET - fixed) // max(per_row, 1)))
    if tw % 8 == 0:
        th = min(th, max(1, rows_max // tw))
    else:
        th = min(th, 8)                           # bounds the unrolled loop

    # v7x: make sure the grid has >= 2 steps so both TensorCores get work.
    if b * d2 * pl.cdiv(h2, th) * pl.cdiv(w2, tw) < 2:
        if h2 > 1:
            th = pl.cdiv(h2, 2)
        elif w2 >= 16:
            tw = min(w2, _round_up(pl.cdiv(w2, 2), 8))

    n_h, n_w = pl.cdiv(h2, th), pl.cdiv(w2, tw)
    n_tok = b * d2 * h2 * w2

    def piece_spec(i, j):
        def imap(bb, dd, hh, ww):
            return (bb, dd, i, hh, j, ww, 0)
        return pl.BlockSpec((None, None, None, th, None, tw, c2in), imap)

    const2 = lambda bb, dd, hh, ww: (0, 0)

    out = pl.pallas_call(
        _merge_ln_linear_kernel,
        out_shape=jax.ShapeDtypeStruct((b, d2, h2, w2, c2), out_dtype),
        grid_spec=pltpu.PrefetchScalarGridSpec(
            num_scalar_prefetch=0,
            grid=(b, d2, n_h, n_w),
            in_specs=[
                piece_spec(0, 0), piece_spec(0, 1),
                piece_spec(1, 0), piece_spec(1, 1),
                pl.BlockSpec((c8, c2), const2),   # resident folded weight
                pl.BlockSpec((2, c2), const2),    # resident colsum / bias
            ],
            out_specs=pl.BlockSpec(
                (None, None, th, tw, c2),
                lambda bb, dd, hh, ww: (bb, dd, hh, ww, 0)),
        ),
        compiler_params=pltpu.CompilerParams(
            dimension_semantics=("parallel",) * 4,
            vmem_limit_bytes=_VMEM_LIMIT,
        ),
        cost_estimate=pl.CostEstimate(
            flops=2 * n_tok * c8 * c2,
            transcendentals=n_tok,
            bytes_accessed=(n_tok * c8 * x_item + n_tok * c2 * x_item
                            + c8 * c2 * w_item)),
    )(xv, xv, xv, xv, w_folded, cb)

    return out


def _reference(x, gamma, beta, weight):
    """Pure-JAX reference mirroring the PyTorch forward literally."""
    b, d, h, w, c = x.shape
    pd, ph, pw = d % 2, h % 2, w % 2
    xp = jnp.pad(x, ((0, 0), (0, pd), (0, ph), (0, pw), (0, 0)))
    merged = jnp.concatenate(
        [xp[:, i::2, j::2, k::2, :]
         for i, j, k in itertools.product(range(2), range(2), range(2))],
        axis=-1).astype(jnp.float32)
    mean = jnp.mean(merged, axis=-1, keepdims=True)
    var = jnp.mean((merged - mean) ** 2, axis=-1, keepdims=True)
    xn = (merged - mean) / jnp.sqrt(var + _LN_EPS)
    xn = xn * gamma.astype(jnp.float32) + beta.astype(jnp.float32)
    return (xn @ weight.astype(jnp.float32)).astype(x.dtype)


if __name__ == "__main__":
    dim = 16                          # module arg `dim` -> 8*dim = 128, 2*dim = 32
    key = jax.random.PRNGKey(0)
    kx1, kx2, kx3, kw, kg, kb = jax.random.split(key, 6)

    gamma = 1.0 + 0.1 * jax.random.normal(kg, (8 * dim,), dtype=jnp.float32)
    beta = 0.1 * jax.random.normal(kb, (8 * dim,), dtype=jnp.float32)
    weight = 0.02 * jax.random.normal(kw, (8 * dim, 2 * dim), dtype=jnp.float32)

    ok = True

    # Case 1: odd spatial dims -> F.pad path + per-row (tw % 8 != 0) kernel branch.
    x1 = jax.random.normal(kx1, (2, 5, 5, 5, dim), dtype=jnp.float32)
    o1 = jax.block_until_ready(patch_merging_v2(x1, gamma, beta, weight))
    r1 = _reference(x1, gamma, beta, weight)
    ok &= o1.shape == (2, 3, 3, 3, 2 * dim)
    ok &= bool(jnp.allclose(o1, r1, atol=1e-4, rtol=1e-4))

    # Case 2: even spatial dims.
    x2 = jax.random.normal(kx2, (2, 4, 8, 8, dim), dtype=jnp.float32)
    o2 = jax.block_until_ready(patch_merging_v2(x2, gamma, beta, weight))
    r2 = _reference(x2, gamma, beta, weight)
    ok &= o2.shape == (2, 2, 4, 4, 2 * dim)
    ok &= bool(jnp.allclose(o2, r2, atol=1e-4, rtol=1e-4))

    # Case 3: w2 % 8 == 0 -> flattened multi-row kernel branch, 2-step grid.
    x3 = jax.random.normal(kx3, (1, 4, 6, 16, dim), dtype=jnp.float32)
    o3 = jax.block_until_ready(patch_merging_v2(x3, gamma, beta, weight))
    r3 = _reference(x3, gamma, beta, weight)
    ok &= o3.shape == (1, 2, 3, 8, 2 * dim)
    ok &= bool(jnp.allclose(o3, r3, atol=1e-4, rtol=1e-4))

    assert ok
    print("KERNEL_OK")
</pallas_src>

<mosaic_0001>
module attributes {stable_mosaic.version = 11 : i64} {
  func.func @_merge_ln_linear_kernel(%arg0: i32, %arg1: i32, %arg2: i32, %arg3: i32, %arg4: memref<1x1x1x3x1x3x32xf32, #tpu.memory_space<vmem>>, %arg5: memref<1x1x1x3x1x3x32xf32, #tpu.memory_space<vmem>>, %arg6: memref<1x1x1x3x1x3x32xf32, #tpu.memory_space<vmem>>, %arg7: memref<1x1x1x3x1x3x32xf32, #tpu.memory_space<vmem>>, %arg8: memref<128x32xf32, #tpu.memory_space<vmem>>, %arg9: memref<2x32xf32, #tpu.memory_space<vmem>>, %arg10: memref<1x1x3x3x32xf32, #tpu.memory_space<vmem>>) attributes {dimension_semantics = [#tpu.dimension_semantics<parallel>, #tpu.dimension_semantics<parallel>, #tpu.dimension_semantics<parallel>, #tpu.dimension_semantics<parallel>], iteration_bounds = array<i64: 2, 3, 1, 1>, scalar_prefetch = 0 : i64, scratch_operands = 0 : i64, tpu.core_type = #tpu.core_type<tc>, window_params = [{transform_indices = @transform_0, window_bounds = array<i64: 1, 1, 1, 3, 1, 3, 32>}, {transform_indices = @transform_1, window_bounds = array<i64: 1, 1, 1, 3, 1, 3, 32>}, {transform_indices = @transform_2, window_bounds = array<i64: 1, 1, 1, 3, 1, 3, 32>}, {transform_indices = @transform_3, window_bounds = array<i64: 1, 1, 1, 3, 1, 3, 32>}, {pipeline_mode = #tpu.pipeline_mode<synchronous>, transform_indices = @transform_4, window_bounds = array<i64: 128, 32>}, {pipeline_mode = #tpu.pipeline_mode<synchronous>, transform_indices = @transform_5, window_bounds = array<i64: 2, 32>}, {transform_indices = @transform_6, window_bounds = array<i64: 1, 1, 3, 3, 32>}]} {
    %c0 = arith.constant 0 : index
    %c0_0 = arith.constant 0 : index
    %0 = vector.load %arg8[%c0, %c0_0] : memref<128x32xf32, #tpu.memory_space<vmem>>, vector<32x32xf32>
    %c32 = arith.constant 32 : index
    %c0_1 = arith.constant 0 : index
    %1 = vector.load %arg8[%c32, %c0_1] : memref<128x32xf32, #tpu.memory_space<vmem>>, vector<32x32xf32>
    %c64 = arith.constant 64 : index
    %c0_2 = arith.constant 0 : index
    %2 = vector.load %arg8[%c64, %c0_2] : memref<128x32xf32, #tpu.memory_space<vmem>>, vector<32x32xf32>
    %c96 = arith.constant 96 : index
    %c0_3 = arith.constant 0 : index
    %3 = vector.load %arg8[%c96, %c0_3] : memref<128x32xf32, #tpu.memory_space<vmem>>, vector<32x32xf32>
    %c0_4 = arith.constant 0 : index
    %c0_5 = arith.constant 0 : index
    %4 = vector.load %arg9[%c0_4, %c0_5] : memref<2x32xf32, #tpu.memory_space<vmem>>, vector<1x32xf32>
    %c1 = arith.constant 1 : index
    %c0_6 = arith.constant 0 : index
    %5 = vector.load %arg9[%c1, %c0_6] : memref<2x32xf32, #tpu.memory_space<vmem>>, vector<1x32xf32>
    %c0_7 = arith.constant 0 : index
    %c0_8 = arith.constant 0 : index
    %c0_9 = arith.constant 0 : index
    %c0_10 = arith.constant 0 : index
    %c0_11 = arith.constant 0 : index
    %c0_12 = arith.constant 0 : index
    %c0_13 = arith.constant 0 : index
    %6 = vector.load %arg4[%c0_7, %c0_8, %c0_9, %c0_10, %c0_11, %c0_12, %c0_13] : memref<1x1x1x3x1x3x32xf32, #tpu.memory_space<vmem>>, vector<1x1x1x1x1x3x32xf32>
    %7 = vector.shape_cast %6 : vector<1x1x1x1x1x3x32xf32> to vector<3x32xf32>
    %c0_14 = arith.constant 0 : index
    %c0_15 = arith.constant 0 : index
    %c0_16 = arith.constant 0 : index
    %c0_17 = arith.constant 0 : index
    %c0_18 = arith.constant 0 : index
    %c0_19 = arith.constant 0 : index
    %c0_20 = arith.constant 0 : index
    %8 = vector.load %arg5[%c0_14, %c0_15, %c0_16, %c0_17, %c0_18, %c0_19, %c0_20] : memref<1x1x1x3x1x3x32xf32, #tpu.memory_space<vmem>>, vector<1x1x1x1x1x3x32xf32>
    %9 = vector.shape_cast %8 : vector<1x1x1x1x1x3x32xf32> to vector<3x32xf32>
    %c0_21 = arith.constant 0 : index
    %c0_22 = arith.constant 0 : index
    %c0_23 = arith.constant 0 : index
    %c0_24 = arith.constant 0 : index
    %c0_25 = arith.constant 0 : index
    %c0_26 = arith.constant 0 : index
    %c0_27 = arith.constant 0 : index
    %10 = vector.load %arg6[%c0_21, %c0_22, %c0_23, %c0_24, %c0_25, %c0_26, %c0_27] : memref<1x1x1x3x1x3x32xf32, #tpu.memory_space<vmem>>, vector<1x1x1x1x1x3x32xf32>
    %11 = vector.shape_cast %10 : vector<1x1x1x1x1x3x32xf32> to vector<3x32xf32>
    %c0_28 = arith.constant 0 : index
    %c0_29 = arith.constant 0 : index
    %c0_30 = arith.constant 0 : index
    %c0_31 = arith.constant 0 : index
    %c0_32 = arith.constant 0 : index
    %c0_33 = arith.constant 0 : index
    %c0_34 = arith.constant 0 : index
    %12 = vector.load %arg7[%c0_28, %c0_29, %c0_30, %c0_31, %c0_32, %c0_33, %c0_34] : memref<1x1x1x3x1x3x32xf32, #tpu.memory_space<vmem>>, vector<1x1x1x1x1x3x32xf32>
    %13 = vector.shape_cast %12 : vector<1x1x1x1x1x3x32xf32> to vector<3x32xf32>
    %cst = arith.constant dense<0.000000e+00> : vector<3xf32>
    %14 = vector.multi_reduction <add>, %7, %cst [1] : vector<3x32xf32> to vector<3xf32>
    %15 = vector.shape_cast %14 : vector<3xf32> to vector<3x1xf32>
    %16 = arith.mulf %7, %7 : vector<3x32xf32>
    %cst_35 = arith.constant dense<0.000000e+00> : vector<3xf32>
    %17 = vector.multi_reduction <add>, %16, %cst_35 [1] : vector<3x32xf32> to vector<3xf32>
    %18 = vector.shape_cast %17 : vector<3xf32> to vector<3x1xf32>
    %cst_36 = arith.constant dense<0.000000e+00> : vector<3x32xf32>
    %19 = tpu.matmul %7, %0, %cst_36 {dimension_numbers = #tpu.dot_dimension_numbers<[1], [0], [0], [1], [0, 0, 1, 1], [], []>} : vector<3x32xf32>, vector<32x32xf32>, vector<3x32xf32> -> vector<3x32xf32>
    %cst_37 = arith.constant dense<0.000000e+00> : vector<3xf32>
    %20 = vector.multi_reduction <add>, %9, %cst_37 [1] : vector<3x32xf32> to vector<3xf32>
    %21 = vector.shape_cast %20 : vector<3xf32> to vector<3x1xf32>
    %22 = arith.mulf %9, %9 : vector<3x32xf32>
    %cst_38 = arith.constant dense<0.000000e+00> : vector<3xf32>
    %23 = vector.multi_reduction <add>, %22, %cst_38 [1] : vector<3x32xf32> to vector<3xf32>
    %24 = vector.shape_cast %23 : vector<3xf32> to vector<3x1xf32>
    %cst_39 = arith.constant dense<0.000000e+00> : vector<3x32xf32>
    %25 = tpu.matmul %9, %1, %cst_39 {dimension_numbers = #tpu.dot_dimension_numbers<[1], [0], [0], [1], [0, 0, 1, 1], [], []>} : vector<3x32xf32>, vector<32x32xf32>, vector<3x32xf32> -> vector<3x32xf32>
    %26 = arith.addf %15, %21 : vector<3x1xf32>
    %27 = arith.addf %18, %24 : vector<3x1xf32>
    %28 = arith.addf %19, %25 : vector<3x32xf32>
    %cst_40 = arith.constant dense<0.000000e+00> : vector<3xf32>
    %29 = vector.multi_reduction <add>, %11, %cst_40 [1] : vector<3x32xf32> to vector<3xf32>
    %30 = vector.shape_cast %29 : vector<3xf32> to vector<3x1xf32>
    %31 = arith.mulf %11, %11 : vector<3x32xf32>
    %cst_41 = arith.constant dense<0.000000e+00> : vector<3xf32>
    %32 = vector.multi_reduction <add>, %31, %cst_41 [1] : vector<3x32xf32> to vector<3xf32>
    %33 = vector.shape_cast %32 : vector<3xf32> to vector<3x1xf32>
    %cst_42 = arith.constant dense<0.000000e+00> : vector<3x32xf32>
    %34 = tpu.matmul %11, %2, %cst_42 {dimension_numbers = #tpu.dot_dimension_numbers<[1], [0], [0], [1], [0, 0, 1, 1], [], []>} : vector<3x32xf32>, vector<32x32xf32>, vector<3x32xf32> -> vector<3x32xf32>
    %35 = arith.addf %26, %30 : vector<3x1xf32>
    %36 = arith.addf %27, %33 : vector<3x1xf32>
    %37 = arith.addf %28, %34 : vector<3x32xf32>
    %cst_43 = arith.constant dense<0.000000e+00> : vector<3xf32>
    %38 = vector.multi_reduction <add>, %13, %cst_43 [1] : vector<3x32xf32> to vector<3xf32>
    %39 = vector.shape_cast %38 : vector<3xf32> to vector<3x1xf32>
    %40 = arith.mulf %13, %13 : vector<3x32xf32>
    %cst_44 = arith.constant dense<0.000000e+00> : vector<3xf32>
    %41 = vector.multi_reduction <add>, %40, %cst_44 [1] : vector<3x32xf32> to vector<3xf32>
    %42 = vector.shape_cast %41 : vector<3xf32> to vector<3x1xf32>
    %cst_45 = arith.constant dense<0.000000e+00> : vector<3x32xf32>
    %43 = tpu.matmul %13, %3, %cst_45 {dimension_numbers = #tpu.dot_dimension_numbers<[1], [0], [0], [1], [0, 0, 1, 1], [], []>} : vector<3x32xf32>, vector<32x32xf32>, vector<3x32xf32> -> vector<3x32xf32>
    %44 = arith.addf %35, %39 : vector<3x1xf32>
    %45 = arith.addf %36, %42 : vector<3x1xf32>
    %46 = arith.addf %37, %43 : vector<3x32xf32>
    %cst_46 = arith.constant 7.812500e-03 : f32
    %47 = vector.broadcast %cst_46 : f32 to vector<3x1xf32>
    %48 = arith.mulf %44, %47 : vector<3x1xf32>
    %cst_47 = arith.constant 7.812500e-03 : f32
    %49 = vector.broadcast %cst_47 : f32 to vector<3x1xf32>
    %50 = arith.mulf %45, %49 : vector<3x1xf32>
    %51 = arith.mulf %48, %48 : vector<3x1xf32>
    %52 = arith.subf %50, %51 : vector<3x1xf32>
    %cst_48 = arith.constant 9.99999974E-6 : f32
    %53 = vector.broadcast %cst_48 : f32 to vector<3x1xf32>
    %54 = arith.addf %52, %53 : vector<3x1xf32>
    %55 = math.rsqrt %54 : vector<3x1xf32>
    %56 = vector.broadcast %48 : vector<3x1xf32> to vector<3x32xf32>
    %57 = vector.broadcast %4 : vector<1x32xf32> to vector<3x32xf32>
    %58 = arith.mulf %56, %57 : vector<3x32xf32>
    %59 = arith.subf %46, %58 : vector<3x32xf32>
    %60 = vector.broadcast %55 : vector<3x1xf32> to vector<3x32xf32>
    %61 = arith.mulf %59, %60 : vector<3x32xf32>
    %62 = vector.broadcast %5 : vector<1x32xf32> to vector<3x32xf32>
    %63 = arith.addf %61, %62 : vector<3x32xf32>
    %c0_49 = arith.constant 0 : index
    %c0_50 = arith.constant 0 : index
    %c0_51 = arith.constant 0 : index
    %c0_52 = arith.constant 0 : index
    %c0_53 = arith.constant 0 : index
    %64 = vector.load %arg10[%c0_49, %c0_50, %c0_51, %c0_52, %c0_53] : memref<1x1x3x3x32xf32, #tpu.memory_space<vmem>>, vector<1x1x1x3x32xf32>
    %65 = vector.shape_cast %64 : vector<1x1x1x3x32xf32> to vector<3x32xf32>
    %66 = vector.shape_cast %63 : vector<3x32xf32> to vector<1x1x1x3x32xf32>
    tpu.vector_store %arg10[%c0_49, %c0_50, %c0_51, %c0_52, %c0_53], %66 {strides = array<i32>} : memref<1x1x3x3x32xf32, #tpu.memory_space<vmem>>, vector<1x1x1x3x32xf32>,
    %c0_54 = arith.constant 0 : index
    %c0_55 = arith.constant 0 : index
    %c0_56 = arith.constant 0 : index
    %c1_57 = arith.constant 1 : index
    %c0_58 = arith.constant 0 : index
    %c0_59 = arith.constant 0 : index
    %c0_60 = arith.constant 0 : index
    %67 = vector.load %arg4[%c0_54, %c0_55, %c0_56, %c1_57, %c0_58, %c0_59, %c0_60] : memref<1x1x1x3x1x3x32xf32, #tpu.memory_space<vmem>>, vector<1x1x1x1x1x3x32xf32>
    %68 = vector.shape_cast %67 : vector<1x1x1x1x1x3x32xf32> to vector<3x32xf32>
    %c0_61 = arith.constant 0 : index
    %c0_62 = arith.constant 0 : index
    %c0_63 = arith.constant 0 : index
    %c1_64 = arith.constant 1 : index
    %c0_65 = arith.constant 0 : index
    %c0_66 = arith.constant 0 : index
    %c0_67 = arith.constant 0 : index
    %69 = vector.load %arg5[%c0_61, %c0_62, %c0_63, %c1_64, %c0_65, %c0_66, %c0_67] : memref<1x1x1x3x1x3x32xf32, #tpu.memory_space<vmem>>, vector<1x1x1x1x1x3x32xf32>
    %70 = vector.shape_cast %69 : vector<1x1x1x1x1x3x32xf32> to vector<3x32xf32>
    %c0_68 = arith.constant 0 : index
    %c0_69 = arith.constant 0 : index
    %c0_70 = arith.constant 0 : index
    %c1_71 = arith.constant 1 : index
    %c0_72 = arith.constant 0 : index
    %c0_73 = arith.constant 0 : index
    %c0_74 = arith.constant 0 : index
    %71 = vector.load %arg6[%c0_68, %c0_69, %c0_70, %c1_71, %c0_72, %c0_73, %c0_74] : memref<1x1x1x3x1x3x32xf32, #tpu.memory_space<vmem>>, vector<1x1x1x1x1x3x32xf32>
    %72 = vector.shape_cast %71 : vector<1x1x1x1x1x3x32xf32> to vector<3x32xf32>
    %c0_75 = arith.constant 0 : index
    %c0_76 = arith.constant 0 : index
    %c0_77 = arith.constant 0 : index
    %c1_78 = arith.constant 1 : index
    %c0_79 = arith.constant 0 : index
    %c0_80 = arith.constant 0 : index
    %c0_81 = arith.constant 0 : index
    %73 = vector.load %arg7[%c0_75, %c0_76, %c0_77, %c1_78, %c0_79, %c0_80, %c0_81] : memref<1x1x1x3x1x3x32xf32, #tpu.memory_space<vmem>>, vector<1x1x1x1x1x3x32xf32>
    %74 = vector.shape_cast %73 : vector<1x1x1x1x1x3x32xf32> to vector<3x32xf32>
    %cst_82 = arith.constant dense<0.000000e+00> : vector<3xf32>
    %75 = vector.multi_reduction <add>, %68, %cst_82 [1] : vector<3x32xf32> to vector<3xf32>
    %76 = vector.shape_cast %75 : vector<3xf32> to vector<3x1xf32>
    %77 = arith.mulf %68, %68 : vector<3x32xf32>
    %cst_83 = arith.constant dense<0.000000e+00> : vector<3xf32>
    %78 = vector.multi_reduction <add>, %77, %cst_83 [1] : vector<3x32xf32> to vector<3xf32>
    %79 = vector.shape_cast %78 : vector<3xf32> to vector<3x1xf32>
    %cst_84 = arith.constant dense<0.000000e+00> : vector<3x32xf32>
    %80 = tpu.matmul %68, %0, %cst_84 {dimension_numbers = #tpu.dot_dimension_numbers<[1], [0], [0], [1], [0, 0, 1, 1], [], []>} : vector<3x32xf32>, vector<32x32xf32>, vector<3x32xf32> -> vector<3x32xf32>
    %cst_85 = arith.constant dense<0.000000e+00> : vector<3xf32>
    %81 = vector.multi_reduction <add>, %70, %cst_85 [1] : vector<3x32xf32> to vector<3xf32>
    %82 = vector.shape_cast %81 : vector<3xf32> to vector<3x1xf32>
    %83 = arith.mulf %70, %70 : vector<3x32xf32>
    %cst_86 = arith.constant dense<0.000000e+00> : vector<3xf32>
    %84 = vector.multi_reduction <add>, %83, %cst_86 [1] : vector<3x32xf32> to vector<3xf32>
    %85 = vector.shape_cast %84 : vector<3xf32> to vector<3x1xf32>
    %cst_87 = arith.constant dense<0.000000e+00> : vector<3x32xf32>
    %86 = tpu.matmul %70, %1, %cst_87 {dimension_numbers = #tpu.dot_dimension_numbers<[1], [0], [0], [1], [0, 0, 1, 1], [], []>} : vector<3x32xf32>, vector<32x32xf32>, vector<3x32xf32> -> vector<3x32xf32>
    %87 = arith.addf %76, %82 : vector<3x1xf32>
    %88 = arith.addf %79, %85 : vector<3x1xf32>
    %89 = arith.addf %80, %86 : vector<3x32xf32>
    %cst_88 = arith.constant dense<0.000000e+00> : vector<3xf32>
    %90 = vector.multi_reduction <add>, %72, %cst_88 [1] : vector<3x32xf32> to vector<3xf32>
    %91 = vector.shape_cast %90 : vector<3xf32> to vector<3x1xf32>
    %92 = arith.mulf %72, %72 : vector<3x32xf32>
    %cst_89 = arith.constant dense<0.000000e+00> : vector<3xf32>
    %93 = vector.multi_reduction <add>, %92, %cst_89 [1] : vector<3x32xf32> to vector<3xf32>
    %94 = vector.shape_cast %93 : vector<3xf32> to vector<3x1xf32>
    %cst_90 = arith.constant dense<0.000000e+00> : vector<3x32xf32>
    %95 = tpu.matmul %72, %2, %cst_90 {dimension_numbers = #tpu.dot_dimension_numbers<[1], [0], [0], [1], [0, 0, 1, 1], [], []>} : vector<3x32xf32>, vector<32x32xf32>, vector<3x32xf32> -> vector<3x32xf32>
    %96 = arith.addf %87, %91 : vector<3x1xf32>
    %97 = arith.addf %88, %94 : vector<3x1xf32>
    %98 = arith.addf %89, %95 : vector<3x32xf32>
    %cst_91 = arith.constant dense<0.000000e+00> : vector<3xf32>
    %99 = vector.multi_reduction <add>, %74, %cst_91 [1] : vector<3x32xf32> to vector<3xf32>
    %100 = vector.shape_cast %99 : vector<3xf32> to vector<3x1xf32>
    %101 = arith.mulf %74, %74 : vector<3x32xf32>
    %cst_92 = arith.constant dense<0.000000e+00> : vector<3xf32>
    %102 = vector.multi_reduction <add>, %101, %cst_92 [1] : vector<3x32xf32> to vector<3xf32>
    %103 = vector.shape_cast %102 : vector<3xf32> to vector<3x1xf32>
    %cst_93 = arith.constant dense<0.000000e+00> : vector<3x32xf32>
    %104 = tpu.matmul %74, %3, %cst_93 {dimension_numbers = #tpu.dot_dimension_numbers<[1], [0], [0], [1], [0, 0, 1, 1], [], []>} : vector<3x32xf32>, vector<32x32xf32>, vector<3x32xf32> -> vector<3x32xf32>
    %105 = arith.addf %96, %100 : vector<3x1xf32>
    %106 = arith.addf %97, %103 : vector<3x1xf32>
    %107 = arith.addf %98, %104 : vector<3x32xf32>
    %cst_94 = arith.constant 7.812500e-03 : f32
    %108 = vector.broadcast %cst_94 : f32 to vector<3x1xf32>
    %109 = arith.mulf %105, %108 : vector<3x1xf32>
    %cst_95 = arith.constant 7.812500e-03 : f32
    %110 = vector.broadcast %cst_95 : f32 to vector<3x1xf32>
    %111 = arith.mulf %106, %110 : vector<3x1xf32>
    %112 = arith.mulf %109, %109 : vector<3x1xf32>
    %113 = arith.subf %111, %112 : vector<3x1xf32>
    %cst_96 = arith.constant 9.99999974E-6 : f32
    %114 = vector.broadcast %cst_96 : f32 to vector<3x1xf32>
    %115 = arith.addf %113, %114 : vector<3x1xf32>
    %116 = math.rsqrt %115 : vector<3x1xf32>
    %117 = vector.broadcast %109 : vector<3x1xf32> to vector<3x32xf32>
    %118 = vector.broadcast %4 : vector<1x32xf32> to vector<3x32xf32>
    %119 = arith.mulf %117, %118 : vector<3x32xf32>
    %120 = arith.subf %107, %119 : vector<3x32xf32>
    %121 = vector.broadcast %116 : vector<3x1xf32> to vector<3x32xf32>
    %122 = arith.mulf %120, %121 : vector<3x32xf32>
    %123 = vector.broadcast %5 : vector<1x32xf32> to vector<3x32xf32>
    %124 = arith.addf %122, %123 : vector<3x32xf32>
    %c0_97 = arith.constant 0 : index
    %c0_98 = arith.constant 0 : index
    %c1_99 = arith.constant 1 : index
    %c0_100 = arith.constant 0 : index
    %c0_101 = arith.constant 0 : index
    %125 = vector.load %arg10[%c0_97, %c0_98, %c1_99, %c0_100, %c0_101] : memref<1x1x3x3x32xf32, #tpu.memory_space<vmem>>, vector<1x1x1x3x32xf32>
    %126 = vector.shape_cast %125 : vector<1x1x1x3x32xf32> to vector<3x32xf32>
    %127 = vector.shape_cast %124 : vector<3x32xf32> to vector<1x1x1x3x32xf32>
    tpu.vector_store %arg10[%c0_97, %c0_98, %c1_99, %c0_100, %c0_101], %127 {strides = array<i32>} : memref<1x1x3x3x32xf32, #tpu.memory_space<vmem>>, vector<1x1x1x3x32xf32>,
    %c0_102 = arith.constant 0 : index
    %c0_103 = arith.constant 0 : index
    %c0_104 = arith.constant 0 : index
    %c2 = arith.constant 2 : index
    %c0_105 = arith.constant 0 : index
    %c0_106 = arith.constant 0 : index
    %c0_107 = arith.constant 0 : index
    %128 = vector.load %arg4[%c0_102, %c0_103, %c0_104, %c2, %c0_105, %c0_106, %c0_107] : memref<1x1x1x3x1x3x32xf32, #tpu.memory_space<vmem>>, vector<1x1x1x1x1x3x32xf32>
    %129 = vector.shape_cast %128 : vector<1x1x1x1x1x3x32xf32> to vector<3x32xf32>
    %c0_108 = arith.constant 0 : index
    %c0_109 = arith.constant 0 : index
    %c0_110 = arith.constant 0 : index
    %c2_111 = arith.constant 2 : index
    %c0_112 = arith.constant 0 : index
    %c0_113 = arith.constant 0 : index
    %c0_114 = arith.constant 0 : index
    %130 = vector.load %arg5[%c0_108, %c0_109, %c0_110, %c2_111, %c0_112, %c0_113, %c0_114] : memref<1x1x1x3x1x3x32xf32, #tpu.memory_space<vmem>>, vector<1x1x1x1x1x3x32xf32>
    %131 = vector.shape_cast %130 : vector<1x1x1x1x1x3x32xf32> to vector<3x32xf32>
    %c0_115 = arith.constant 0 : index
    %c0_116 = arith.constant 0 : index
    %c0_117 = arith.constant 0 : index
    %c2_118 = arith.constant 2 : index
    %c0_119 = arith.constant 0 : index
    %c0_120 = arith.constant 0 : index
    %c0_121 = arith.constant 0 : index
    %132 = vector.load %arg6[%c0_115, %c0_116, %c0_117, %c2_118, %c0_119, %c0_120, %c0_121] : memref<1x1x1x3x1x3x32xf32, #tpu.memory_space<vmem>>, vector<1x1x1x1x1x3x32xf32>
    %133 = vector.shape_cast %132 : vector<1x1x1x1x1x3x32xf32> to vector<3x32xf32>
    %c0_122 = arith.constant 0 : index
    %c0_123 = arith.constant 0 : index
    %c0_124 = arith.constant 0 : index
    %c2_125 = arith.constant 2 : index
    %c0_126 = arith.constant 0 : index
    %c0_127 = arith.constant 0 : index
    %c0_128 = arith.constant 0 : index
    %134 = vector.load %arg7[%c0_122, %c0_123, %c0_124, %c2_125, %c0_126, %c0_127, %c0_128] : memref<1x1x1x3x1x3x32xf32, #tpu.memory_space<vmem>>, vector<1x1x1x1x1x3x32xf32>
    %135 = vector.shape_cast %134 : vector<1x1x1x1x1x3x32xf32> to vector<3x32xf32>
    %cst_129 = arith.constant dense<0.000000e+00> : vector<3xf32>
    %136 = vector.multi_reduction <add>, %129, %cst_129 [1] : vector<3x32xf32> to vector<3xf32>
    %137 = vector.shape_cast %136 : vector<3xf32> to vector<3x1xf32>
    %138 = arith.mulf %129, %129 : vector<3x32xf32>
    %cst_130 = arith.constant dense<0.000000e+00> : vector<3xf32>
    %139 = vector.multi_reduction <add>, %138, %cst_130 [1] : vector<3x32xf32> to vector<3xf32>
    %140 = vector.shape_cast %139 : vector<3xf32> to vector<3x1xf32>
    %cst_131 = arith.constant dense<0.000000e+00> : vector<3x32xf32>
    %141 = tpu.matmul %129, %0, %cst_131 {dimension_numbers = #tpu.dot_dimension_numbers<[1], [0], [0], [1], [0, 0, 1, 1], [], []>} : vector<3x32xf32>, vector<32x32xf32>, vector<3x32xf32> -> vector<3x32xf32>
    %cst_132 = arith.constant dense<0.000000e+00> : vector<3xf32>
    %142 = vector.multi_reduction <add>, %131, %cst_132 [1] : vector<3x32xf32> to vector<3xf32>
    %143 = vector.shape_cast %142 : vector<3xf32> to vector<3x1xf32>
    %144 = arith.mulf %131, %131 : vector<3x32xf32>
    %cst_133 = arith.constant dense<0.000000e+00> : vector<3xf32>
    %145 = vector.multi_reduction <add>, %144, %cst_133 [1] : vector<3x32xf32> to vector<3xf32>
    %146 = vector.shape_cast %145 : vector<3xf32> to vector<3x1xf32>
    %cst_134 = arith.constant dense<0.000000e+00> : vector<3x32xf32>
    %147 = tpu.matmul %131, %1, %cst_134 {dimension_numbers = #tpu.dot_dimension_numbers<[1], [0], [0], [1], [0, 0, 1, 1], [], []>} : vector<3x32xf32>, vector<32x32xf32>, vector<3x32xf32> -> vector<3x32xf32>
    %148 = arith.addf %137, %143 : vector<3x1xf32>
    %149 = arith.addf %140, %146 : vector<3x1xf32>
    %150 = arith.addf %141, %147 : vector<3x32xf32>
    %cst_135 = arith.constant dense<0.000000e+00> : vector<3xf32>
    %151 = vector.multi_reduction <add>, %133, %cst_135 [1] : vector<3x32xf32> to vector<3xf32>
    %152 = vector.shape_cast %151 : vector<3xf32> to vector<3x1xf32>
    %153 = arith.mulf %133, %133 : vector<3x32xf32>
    %cst_136 = arith.constant dense<0.000000e+00> : vector<3xf32>
    %154 = vector.multi_reduction <add>, %153, %cst_136 [1] : vector<3x32xf32> to vector<3xf32>
    %155 = vector.shape_cast %154 : vector<3xf32> to vector<3x1xf32>
    %cst_137 = arith.constant dense<0.000000e+00> : vector<3x32xf32>
    %156 = tpu.matmul %133, %2, %cst_137 {dimension_numbers = #tpu.dot_dimension_numbers<[1], [0], [0], [1], [0, 0, 1, 1], [], []>} : vector<3x32xf32>, vector<32x32xf32>, vector<3x32xf32> -> vector<3x32xf32>
    %157 = arith.addf %148, %152 : vector<3x1xf32>
    %158 = arith.addf %149, %155 : vector<3x1xf32>
    %159 = arith.addf %150, %156 : vector<3x32xf32>
    %cst_138 = arith.constant dense<0.000000e+00> : vector<3xf32>
    %160 = vector.multi_reduction <add>, %135, %cst_138 [1] : vector<3x32xf32> to vector<3xf32>
    %161 = vector.shape_cast %160 : vector<3xf32> to vector<3x1xf32>
    %162 = arith.mulf %135, %135 : vector<3x32xf32>
    %cst_139 = arith.constant dense<0.000000e+00> : vector<3xf32>
    %163 = vector.multi_reduction <add>, %162, %cst_139 [1] : vector<3x32xf32> to vector<3xf32>
    %164 = vector.shape_cast %163 : vector<3xf32> to vector<3x1xf32>
    %cst_140 = arith.constant dense<0.000000e+00> : vector<3x32xf32>
    %165 = tpu.matmul %135, %3, %cst_140 {dimension_numbers = #tpu.dot_dimension_numbers<[1], [0], [0], [1], [0, 0, 1, 1], [], []>} : vector<3x32xf32>, vector<32x32xf32>, vector<3x32xf32> -> vector<3x32xf32>
    %166 = arith.addf %157, %161 : vector<3x1xf32>
    %167 = arith.addf %158, %164 : vector<3x1xf32>
    %168 = arith.addf %159, %165 : vector<3x32xf32>
    %cst_141 = arith.constant 7.812500e-03 : f32
    %169 = vector.broadcast %cst_141 : f32 to vector<3x1xf32>
    %170 = arith.mulf %166, %169 : vector<3x1xf32>
    %cst_142 = arith.constant 7.812500e-03 : f32
    %171 = vector.broadcast %cst_142 : f32 to vector<3x1xf32>
    %172 = arith.mulf %167, %171 : vector<3x1xf32>
    %173 = arith.mulf %170, %170 : vector<3x1xf32>
    %174 = arith.subf %172, %173 : vector<3x1xf32>
    %cst_143 = arith.constant 9.99999974E-6 : f32
    %175 = vector.broadcast %cst_143 : f32 to vector<3x1xf32>
    %176 = arith.addf %174, %175 : vector<3x1xf32>
    %177 = math.rsqrt %176 : vector<3x1xf32>
    %178 = vector.broadcast %170 : vector<3x1xf32> to vector<3x32xf32>
    %179 = vector.broadcast %4 : vector<1x32xf32> to vector<3x32xf32>
    %180 = arith.mulf %178, %179 : vector<3x32xf32>
    %181 = arith.subf %168, %180 : vector<3x32xf32>
    %182 = vector.broadcast %177 : vector<3x1xf32> to vector<3x32xf32>
    %183 = arith.mulf %181, %182 : vector<3x32xf32>
    %184 = vector.broadcast %5 : vector<1x32xf32> to vector<3x32xf32>
    %185 = arith.addf %183, %184 : vector<3x32xf32>
    %c0_144 = arith.constant 0 : index
    %c0_145 = arith.constant 0 : index
    %c2_146 = arith.constant 2 : index
    %c0_147 = arith.constant 0 : index
    %c0_148 = arith.constant 0 : index
    %186 = vector.load %arg10[%c0_144, %c0_145, %c2_146, %c0_147, %c0_148] : memref<1x1x3x3x32xf32, #tpu.memory_space<vmem>>, vector<1x1x1x3x32xf32>
    %187 = vector.shape_cast %186 : vector<1x1x1x3x32xf32> to vector<3x32xf32>
    %188 = vector.shape_cast %185 : vector<3x32xf32> to vector<1x1x1x3x32xf32>
    tpu.vector_store %arg10[%c0_144, %c0_145, %c2_146, %c0_147, %c0_148], %188 {strides = array<i32>} : memref<1x1x3x3x32xf32, #tpu.memory_space<vmem>>, vector<1x1x1x3x32xf32>,
    return
  }
  func.func @transform_0(%arg0: i32, %arg1: i32, %arg2: i32, %arg3: i32) -> (i32, i32, i32, i32, i32, i32, i32) {
    %c0_i32 = arith.constant 0 : i32
    %c0_i32_0 = arith.constant 0 : i32
    %c0_i32_1 = arith.constant 0 : i32
    %c0_i32_2 = arith.constant 0 : i32
    return %arg0, %arg1, %c0_i32, %arg2, %c0_i32_0, %arg3, %c0_i32_1 : i32, i32, i32, i32, i32, i32, i32
  }
  func.func @transform_1(%arg0: i32, %arg1: i32, %arg2: i32, %arg3: i32) -> (i32, i32, i32, i32, i32, i32, i32) {
    %c0_i32 = arith.constant 0 : i32
    %c1_i32 = arith.constant 1 : i32
    %c0_i32_0 = arith.constant 0 : i32
    %c0_i32_1 = arith.constant 0 : i32
    return %arg0, %arg1, %c0_i32, %arg2, %c1_i32, %arg3, %c0_i32_0 : i32, i32, i32, i32, i32, i32, i32
  }
  func.func @transform_2(%arg0: i32, %arg1: i32, %arg2: i32, %arg3: i32) -> (i32, i32, i32, i32, i32, i32, i32) {
    %c1_i32 = arith.constant 1 : i32
    %c0_i32 = arith.constant 0 : i32
    %c0_i32_0 = arith.constant 0 : i32
    %c0_i32_1 = arith.constant 0 : i32
    return %arg0, %arg1, %c1_i32, %arg2, %c0_i32, %arg3, %c0_i32_0 : i32, i32, i32, i32, i32, i32, i32
  }
  func.func @transform_3(%arg0: i32, %arg1: i32, %arg2: i32, %arg3: i32) -> (i32, i32, i32, i32, i32, i32, i32) {
    %c1_i32 = arith.constant 1 : i32
    %c1_i32_0 = arith.constant 1 : i32
    %c0_i32 = arith.constant 0 : i32
    %c0_i32_1 = arith.constant 0 : i32
    return %arg0, %arg1, %c1_i32, %arg2, %c1_i32_0, %arg3, %c0_i32 : i32, i32, i32, i32, i32, i32, i32
  }
  func.func @transform_4(%arg0: i32, %arg1: i32, %arg2: i32, %arg3: i32) -> (i32, i32) {
    %c0_i32 = arith.constant 0 : i32
    %c0_i32_0 = arith.constant 0 : i32
    %c0_i32_1 = arith.constant 0 : i32
    return %c0_i32, %c0_i32_0 : i32, i32
  }
  func.func @transform_5(%arg0: i32, %arg1: i32, %arg2: i32, %arg3: i32) -> (i32, i32) {
    %c0_i32 = arith.constant 0 : i32
    %c0_i32_0 = arith.constant 0 : i32
    %c0_i32_1 = arith.constant 0 : i32
    return %c0_i32, %c0_i32_0 : i32, i32
  }
  func.func @transform_6(%arg0: i32, %arg1: i32, %arg2: i32, %arg3: i32) -> (i32, i32, i32, i32, i32) {
    %c0_i32 = arith.constant 0 : i32
    %c0_i32_0 = arith.constant 0 : i32
    return %arg0, %arg1, %arg2, %arg3, %c0_i32 : i32, i32, i32, i32, i32
  }
}

</mosaic_0001>

<llo_original>
// kernel: patch_merging_v2.1
$region0: #{patch_merging_v2.1}
  #allocation0 [shape = 'u32[]', space=smem, size = 0x4, offset = 0x4, fixed_abs, tag = 'smem constant byte address 0x4 - core index']
  #allocation1 [shape = 'u32[144,128]{1,0:T(1,128)}', space=vmem, size = 0x12000, scoped, tag = 'internal scratch']
  %s0 = inlined_call_operand.vmem [shape: f32[2,3,2,3,2,3,32], index: 0, kind: input, shape index: {}, may-alias: {0,1,2,3}]
  %s1 = inlined_call_operand.vmem [shape: f32[2,3,2,3,2,3,32], index: 1, kind: input, shape index: {}, may-alias: {0,1,2,3}]
  %s2 = inlined_call_operand.vmem [shape: f32[2,3,2,3,2,3,32], index: 2, kind: input, shape index: {}, may-alias: {0,1,2,3}]
  %s3 = inlined_call_operand.vmem [shape: f32[2,3,2,3,2,3,32], index: 3, kind: input, shape index: {}, may-alias: {0,1,2,3}]
  %s4 = inlined_call_operand.vmem [shape: f32[128,32], index: 4, kind: input, shape index: {}]
  %s5 = inlined_call_operand.vmem [shape: f32[2,32], index: 5, kind: input, shape index: {}]
  %s6 = inlined_call_operand.vmem [shape: f32[2,3,3,3,32], index: 6, kind: output, shape index: {}]
  %s7 = sld [smem:[#allocation0]]
  $region221: #{patch_merging_v2.1} parent=0
    _
  %s9 = ssub.s32 1, %s7
  %s10 = scalar_select 0, %s9, %s7
  $region1: #{patch_merging_v2.1} parent=0
    #allocation2 [shape = 'u8[12288]{0}', space=vmem, size = 0x3000, scoped, tag = 'input window, operand 0']
    #allocation3 [shape = 'u8[12288]{0}', space=vmem, size = 0x3000, scoped, tag = 'input window, operand 1']
    #allocation4 [shape = 'u8[12288]{0}', space=vmem, size = 0x3000, scoped, tag = 'input window, operand 2']
    #allocation5 [shape = 'u8[12288]{0}', space=vmem, size = 0x3000, scoped, tag = 'input window, operand 3']
    loop: start=0, step=1, limit=8
    $region2: #{patch_merging_v2.1} parent=1 // loop_pre_header
      _
    $region3: #{patch_merging_v2.1} parent=1 // loop_header
      %s12 = sphi 0, %s16
      %p13 = scmp.ge.s32.totalorder %s12, 8
      %s19 = sphi 0, %s45
      %s20 = sphi 0, %s41
      %s21 = sphi 0, %s37
      %s22 = sphi 0, %s33
      %s23 = sphi 0, %s19
      %s24 = sphi 0, %s20
      %s25 = sphi 0, %s21
      %s26 = sphi 0, %s22
      %s27 = sphi 0, %s23
      %s28 = sphi 0, %s24
      %s29 = sphi 0, %s25
      %s30 = sphi 0, %s26
      %s54 = sphi 0, %s56
      %s57 = sphi 0, %s54
      %s58 = sphi 0, %s57
      %s74 = sphi 0, %s58
      %s86 = sphi 0, %s88
      %s89 = sphi 0, %s86
      %s90 = sphi 0, %s89
      %s106 = sphi 0, %s90
      %s118 = sphi 0, %s120
      %s121 = sphi 0, %s118
      %s122 = sphi 0, %s121
      %s138 = sphi 0, %s122
      %s150 = sphi 0, %s152
      %s153 = sphi 0, %s150
      %s154 = sphi 0, %s153
      %s170 = sphi 0, %s154
      %s174 = sphi 0, %s174
      %s176 = sphi 0, %s174
      %s177 = sphi 0, %s176
      %s191 = sphi 0, %s177
      %s195 = sphi 0, %s195
      %s197 = sphi 0, %s195
      %s198 = sphi 0, %s197
      %s212 = sphi 0, %s198
      %s224 = sphi 0, %s226
      %s227 = sphi 0, %s224
      %s228 = sphi 0, %s227
      %s244 = sphi 0, %s228
    $region4: #{patch_merging_v2.1} parent=1 // loop_header_branch
      %15 = sbr.rel (%p13) target = $region8
    $region5: #{patch_merging_v2.1} parent=1 // loop_body
      %s17 = ssub.s32 %s12, 1
      %s18 = ssub.s32 %s12, 2
      %s31 = sadd.s32 1, %s22
      %p32 = scmp.ge.s32.totalorder %s31, 1
      %s33 = scalar_select %p32, 0, %s31
      %s34 = sadd.s32 1, %s21
      %s35 = scalar_select %p32, %s34, %s21
      %p36 = scmp.ge.s32.totalorder %s35, 1
      %s37 = scalar_select %p36, 0, %s35
      %s38 = sadd.s32 1, %s20
      %s39 = scalar_select %p36, %s38, %s20
      %p40 = scmp.ge.s32.totalorder %s39, 3
      %s41 = scalar_select %p40, 0, %s39
      %s42 = sadd.s32 1, %s19
      %s43 = scalar_select %p40, %s42, %s19
      %p44 = scmp.ge.s32.totalorder %s43, 2
      %s45 = scalar_select %p44, 0, %s43
      %s46 = ssub.s32 %s19, %s45
      %s47 = ssub.s32 %s20, %s41
      %s48 = sor.u32 %s46, %s47
      %s49 = ssub.s32 %s21, %s37
      %s50 = sor.u32 %s48, %s49
      %s51 = ssub.s32 %s22, %s33
      %s52 = sor.u32 %s50, %s51
      %p53 = scmp.eq.s32.totalorder %s52, 0
      %s55 = sadd.s32 %s54, 1
      %s56 = scalar_select %p53, %s54, %s55
      %p59 = pneg %p53
      %p60 = scmp.eq.s32.totalorder %s12, 5
      %p61 = por %p59, %p60
      %p62 = scmp.ne.s32.totalorder %s54, %s57
      %p63 = scmp.eq.s32.totalorder %s12, 0
      %p64 = por %p62, %p63
      %p65 = scmp.ne.s32.totalorder %s54, %s57
      %p66 = scmp.eq.s32.totalorder %s17, 5
      %p67 = por %p65, %p66
      %p68 = scmp.ne.s32.totalorder %s57, %s58
      %p69 = scmp.eq.s32.totalorder %s17, 0
      %p70 = por %p68, %p69
      %p71 = scmp.ne.s32.totalorder %s57, %s58
      %p72 = scmp.eq.s32.totalorder %s18, 5
      %p73 = por %p71, %p72
      %p75 = scmp.ne.s32.totalorder %s58, %s74
      %p76 = scmp.eq.s32.totalorder %s18, 0
      %p77 = por %p75, %p76
      %s78 = ssub.s32 %s19, %s45
      %s79 = ssub.s32 %s20, %s41
      %s80 = sor.u32 %s78, %s79
      %s81 = ssub.s32 %s21, %s37
      %s82 = sor.u32 %s80, %s81
      %s83 = ssub.s32 %s22, %s33
      %s84 = sor.u32 %s82, %s83
      %p85 = scmp.eq.s32.totalorder %s84, 0
      %s87 = sadd.s32 %s86, 1
      %s88 = scalar_select %p85, %s86, %s87
      %p91 = pneg %p85
      %p92 = scmp.eq.s32.totalorder %s12, 5
      %p93 = por %p91, %p92
      %p94 = scmp.ne.s32.totalorder %s86, %s89
      %p95 = scmp.eq.s32.totalorder %s12, 0
      %p96 = por %p94, %p95
      %p97 = scmp.ne.s32.totalorder %s86, %s89
      %p98 = scmp.eq.s32.totalorder %s17, 5
      %p99 = por %p97, %p98
      %p100 = scmp.ne.s32.totalorder %s89, %s90
      %p101 = scmp.eq.s32.totalorder %s17, 0
      %p102 = por %p100, %p101
      %p103 = scmp.ne.s32.totalorder %s89, %s90
      %p104 = scmp.eq.s32.totalorder %s18, 5
      %p105 = por %p103, %p104
      %p107 = scmp.ne.s32.totalorder %s90, %s106
      %p108 = scmp.eq.s32.totalorder %s18, 0
      %p109 = por %p107, %p108
      %s110 = ssub.s32 %s19, %s45
      %s111 = ssub.s32 %s20, %s41
      %s112 = sor.u32 %s110, %s111
      %s113 = ssub.s32 %s21, %s37
      %s114 = sor.u32 %s112, %s113
      %s115 = ssub.s32 %s22, %s33
      %s116 = sor.u32 %s114, %s115
      %p117 = scmp.eq.s32.totalorder %s116, 0
      %s119 = sadd.s32 %s118, 1
      %s120 = scalar_select %p117, %s118, %s119
      %p123 = pneg %p117
      %p124 = scmp.eq.s32.totalorder %s12, 5
      %p125 = por %p123, %p124
      %p126 = scmp.ne.s32.totalorder %s118, %s121
      %p127 = scmp.eq.s32.totalorder %s12, 0
      %p128 = por %p126, %p127
      %p129 = scmp.ne.s32.totalorder %s118, %s121
      %p130 = scmp.eq.s32.totalorder %s17, 5
      %p131 = por %p129, %p130
      %p132 = scmp.ne.s32.totalorder %s121, %s122
      %p133 = scmp.eq.s32.totalorder %s17, 0
      %p134 = por %p132, %p133
      %p135 = scmp.ne.s32.totalorder %s121, %s122
      %p136 = scmp.eq.s32.totalorder %s18, 5
      %p137 = por %p135, %p136
      %p139 = scmp.ne.s32.totalorder %s122, %s138
      %p140 = scmp.eq.s32.totalorder %s18, 0
      %p141 = por %p139, %p140
      %s142 = ssub.s32 %s19, %s45
      %s143 = ssub.s32 %s20, %s41
      %s144 = sor.u32 %s142, %s143
      %s145 = ssub.s32 %s21, %s37
      %s146 = sor.u32 %s144, %s145
      %s147 = ssub.s32 %s22, %s33
      %s148 = sor.u32 %s146, %s147
      %p149 = scmp.eq.s32.totalorder %s148, 0
      %s151 = sadd.s32 %s150, 1
      %s152 = scalar_select %p149, %s150, %s151
      %p155 = pneg %p149
      %p156 = scmp.eq.s32.totalorder %s12, 5
      %p157 = por %p155, %p156
      %p158 = scmp.ne.s32.totalorder %s150, %s153
      %p159 = scmp.eq.s32.totalorder %s12, 0
      %p160 = por %p158, %p159
      %p161 = scmp.ne.s32.totalorder %s150, %s153
      %p162 = scmp.eq.s32.totalorder %s17, 5
      %p163 = por %p161, %p162
      %p164 = scmp.ne.s32.totalorder %s153, %s154
      %p165 = scmp.eq.s32.totalorder %s17, 0
      %p166 = por %p164, %p165
      %p167 = scmp.ne.s32.totalorder %s153, %s154
      %p168 = scmp.eq.s32.totalorder %s18, 5
      %p169 = por %p167, %p168
      %p171 = scmp.ne.s32.totalorder %s154, %s170
      %p172 = scmp.eq.s32.totalorder %s18, 0
      %p173 = por %p171, %p172
      %s175 = sadd.s32 %s174, 1
      %p178 = scmp.eq.s32.totalorder %s12, 5
      %p179 = scmp.ne.s32.totalorder %s174, %s176
      %p180 = scmp.eq.s32.totalorder %s12, 0
      %p181 = por %p179, %p180
      %p182 = scmp.ne.s32.totalorder %s174, %s176
      %p183 = scmp.eq.s32.totalorder %s17, 5
      %p184 = por %p182, %p183
      %p185 = scmp.ne.s32.totalorder %s176, %s177
      %p186 = scmp.eq.s32.totalorder %s17, 0
      %p187 = por %p185, %p186
      %p188 = scmp.ne.s32.totalorder %s176, %s177
      %p189 = scmp.eq.s32.totalorder %s18, 5
      %p190 = por %p188, %p189
      %p192 = scmp.ne.s32.totalorder %s177, %s191
      %p193 = scmp.eq.s32.totalorder %s18, 0
      %p194 = por %p192, %p193
      %s196 = sadd.s32 %s195, 1
      %p199 = scmp.eq.s32.totalorder %s12, 5
      %p200 = scmp.ne.s32.totalorder %s195, %s197
      %p201 = scmp.eq.s32.totalorder %s12, 0
      %p202 = por %p200, %p201
      %p203 = scmp.ne.s32.totalorder %s195, %s197
      %p204 = scmp.eq.s32.totalorder %s17, 5
      %p205 = por %p203, %p204
      %p206 = scmp.ne.s32.totalorder %s197, %s198
      %p207 = scmp.eq.s32.totalorder %s17, 0
      %p208 = por %p206, %p207
      %p209 = scmp.ne.s32.totalorder %s197, %s198
      %p210 = scmp.eq.s32.totalorder %s18, 5
      %p211 = por %p209, %p210
      %p213 = scmp.ne.s32.totalorder %s198, %s212
      %p214 = scmp.eq.s32.totalorder %s18, 0
      %p215 = por %p213, %p214
      %s216 = ssub.s32 %s19, %s45
      %s217 = ssub.s32 %s20, %s41
      %s218 = sor.u32 %s216, %s217
      %s219 = ssub.s32 %s21, %s37
      %s220 = sor.u32 %s218, %s219
      %s221 = ssub.s32 %s22, %s33
      %s222 = sor.u32 %s220, %s221
      %p223 = scmp.eq.s32.totalorder %s222, 0
      %s225 = sadd.s32 %s224, 1
      %s226 = scalar_select %p223, %s224, %s225
      %p229 = pneg %p223
      %p230 = scmp.eq.s32.totalorder %s12, 5
      %p231 = por %p229, %p230
      %p232 = scmp.ne.s32.totalorder %s224, %s227
      %p233 = scmp.eq.s32.totalorder %s12, 0
      %p234 = por %p232, %p233
      %p235 = scmp.ne.s32.totalorder %s224, %s227
      %p236 = scmp.eq.s32.totalorder %s17, 5
      %p237 = por %p235, %p236
      %p238 = scmp.ne.s32.totalorder %s227, %s228
      %p239 = scmp.eq.s32.totalorder %s17, 0
      %p240 = por %p238, %p239
      %p241 = scmp.ne.s32.totalorder %s227, %s228
      %p242 = scmp.eq.s32.totalorder %s18, 5
      %p243 = por %p241, %p242
      %p245 = scmp.ne.s32.totalorder %s228, %s244
      %p246 = scmp.eq.s32.totalorder %s18, 0
      %p247 = por %p245, %p246
      %p248 = scmp.le.s32.totalorder 1, %s12
      %p249 = scmp.lt.s32.totalorder %s12, 7
      %p250 = pnand %p248, %p249
      %p251 = pneg %p250
      // Predicated region
      $region9: #{patch_merging_v2.1} parent=5 // pred_check
        _
      $region10: #{patch_merging_v2.1} parent=5 // pred_check_branch
        %253 = sbr.rel (%p250) target = $region12
      $region11: #{patch_merging_v2.1} parent=5 // pred_region
        %s254 = ssub.s32 %s12, 1
        // Predicated region
        $region13: #{patch_merging_v2.1} parent=11 // pred_check
          %p255 = pneg %p187
        $region14: #{patch_merging_v2.1} parent=11 // pred_check_branch
          %257 = sbr.rel (%p255) target = $region16
        $region15: #{patch_merging_v2.1} parent=11 // pred_region
          _
        $region16: #{patch_merging_v2.1} parent=11 // pred_fallthru
          _
        // Predicated region
        $region17: #{patch_merging_v2.1} parent=11 // pred_check
          %p258 = pneg %p208
        $region18: #{patch_merging_v2.1} parent=11 // pred_check_branch
          %260 = sbr.rel (%p258) target = $region20
        $region19: #{patch_merging_v2.1} parent=11 // pred_region
          _
        $region20: #{patch_merging_v2.1} parent=11 // pred_fallthru
          _
      $region12: #{patch_merging_v2.1} parent=5 // pred_fallthru
        _
      %p261 = scmp.lt.s32.totalorder %s12, 6
      // Predicated region
      $region21: #{patch_merging_v2.1} parent=5 // pred_check
        %p262 = pneg %p261
      $region22: #{patch_merging_v2.1} parent=5 // pred_check_branch
        %264 = sbr.rel (%p262) target = $region24
      $region23: #{patch_merging_v2.1} parent=5 // pred_region
        // Predicated region
        $region25: #{patch_merging_v2.1} parent=23 // pred_check
          %p265 = pneg %p64
        $region26: #{patch_merging_v2.1} parent=23 // pred_check_branch
          %267 = sbr.rel (%p265) target = $region28
        $region27: #{patch_merging_v2.1} parent=23 // pred_region
          %s268 = sand.u32 %s54, 1
          %s269 = sand.u32 %s54, 1
          %s270 = smul.addr %s269, 12
          %s271 = scalar_lea.vmem [#allocation2], %s270
          %s272 = smul.u32 3, %s21
          %s273 = smul.addr %s272, 2
          %s274 = sadd.s32 %s22, %s273
          %s275 = smul.addr %s20, 12
          %s276 = sadd.s32 %s274, %s275
          %s277 = smul.addr %s19, 36
          %s278 = sadd.s32 %s276, %s277
          %s279 = smul.addr %s278, 4
          %s280 = scalar_lea.vmem %s0, %s279
          // Predicated region
          $region29: #{patch_merging_v2.1} parent=27 // pred_check
            _
          $region30: #{patch_merging_v2.1} parent=27 // pred_check_branch
            %282 = sbr.rel (0) target = $region32
          $region31: #{patch_merging_v2.1} parent=27 // pred_region
            // Predicated region
            $region33: #{patch_merging_v2.1} parent=31 // pred_check
              _
            $region34: #{patch_merging_v2.1} parent=31 // pred_check_branch
              %284 = sbr.rel target = $region36
            $region35: #{patch_merging_v2.1} parent=31 // pred_region
              // Predicated region
              $region48: #{patch_merging_v2.1} parent=35 // pred_check
                _
              $region49: #{patch_merging_v2.1} parent=35 // pred_check_branch
                %303 = sbr.rel (0) target = $region51
              $region50: #{patch_merging_v2.1} parent=35 // pred_region
                loop: start=0, step=1, limit=1
                $region52: #{patch_merging_v2.1} parent=50 // loop_pre_header
                  _
                $region53: #{patch_merging_v2.1} parent=50 // loop_header
                  %s305 = sphi 0, %s309
                  %p306 = scmp.ge.s32.totalorder %s305, 1
                  %s310 = sphi %s280, %s280
                  %s311 = sphi %s271, %s271
                $region54: #{patch_merging_v2.1} parent=50 // loop_header_branch
                  %308 = sbr.rel (%p306) target = $region58
                $region55: #{patch_merging_v2.1} parent=50 // loop_body
                  _
                $region56: #{patch_merging_v2.1} parent=50 // loop_footer
                  %s309 = sadd.s32 1, %s305
                $region57: #{patch_merging_v2.1} parent=50 // loop_footer_branch
                  %304 = sbr.rel target = $region53
                $region58: #{patch_merging_v2.1} parent=50 // loop_exit
                  _
                loop: start=0, step=1, limit=1
                $region59: #{patch_merging_v2.1} parent=50 // loop_pre_header
                  _
                $region60: #{patch_merging_v2.1} parent=50 // loop_header
                  %s314 = sphi 0, %s318
                  %p315 = scmp.ge.s32.totalorder %s314, 1
                  %s319 = sphi %s280, %s280
                  %s320 = sphi %s271, %s271
                $region61: #{patch_merging_v2.1} parent=50 // loop_header_branch
                  %317 = sbr.rel (%p315) target = $region65
                $region62: #{patch_merging_v2.1} parent=50 // loop_body
                  %v321 = vld [vmem:[%s319] sm:$0xf]
                  %322 = vst [vmem:[%s320] sm:$0xf] %v321
                  %v323 = vld [vmem:[%s319 + $0x8] sm:$0xf]
                  %324 = vst [vmem:[%s320 + $0x4] sm:$0xf] %v323
                  %v325 = vld [vmem:[%s319 + $0x10] sm:$0xf]
                  %326 = vst [vmem:[%s320 + $0x8] sm:$0xf] %v325
                $region63: #{patch_merging_v2.1} parent=50 // loop_footer
                  %s318 = sadd.s32 1, %s314
                $region64: #{patch_merging_v2.1} parent=50 // loop_footer_branch
                  %313 = sbr.rel target = $region60
                $region65: #{patch_merging_v2.1} parent=50 // loop_exit
                  _
              $region51: #{patch_merging_v2.1} parent=35 // pred_fallthru
                _
            $region36: #{patch_merging_v2.1} parent=31 // pred_fallthru
              _
            // Predicated region
            $region37: #{patch_merging_v2.1} parent=31 // pred_check
              _
            $region38: #{patch_merging_v2.1} parent=31 // pred_check_branch
              %286 = sbr.rel (0) target = $region40
            $region39: #{patch_merging_v2.1} parent=31 // pred_region
              loop: start=0, step=1, limit=1
              $region41: #{patch_merging_v2.1} parent=39 // loop_pre_header
                _
              $region42: #{patch_merging_v2.1} parent=39 // loop_header
                %s289 = sphi 0, %s293
                %p290 = scmp.ge.s32.totalorder %s289, 1
                %s294 = sphi %s280, %s280
                %s295 = sphi %s271, %s271
              $region43: #{patch_merging_v2.1} parent=39 // loop_header_branch
                %292 = sbr.rel (%p290) target = $region47
              $region44: #{patch_merging_v2.1} parent=39 // loop_body
                %v296 = vld [vmem:[%s294] sm:$0xf]
                %297 = vst [vmem:[%s295] sm:$0xf] %v296
                %v298 = vld [vmem:[%s294 + $0x8] sm:$0xf]
                %299 = vst [vmem:[%s295 + $0x4] sm:$0xf] %v298
                %v300 = vld [vmem:[%s294 + $0x10] sm:$0xf]
                %301 = vst [vmem:[%s295 + $0x8] sm:$0xf] %v300
              $region45: #{patch_merging_v2.1} parent=39 // loop_footer
                %s293 = sadd.s32 1, %s289
              $region46: #{patch_merging_v2.1} parent=39 // loop_footer_branch
                %288 = sbr.rel target = $region42
              $region47: #{patch_merging_v2.1} parent=39 // loop_exit
                _
            $region40: #{patch_merging_v2.1} parent=31 // pred_fallthru
              _
          $region32: #{patch_merging_v2.1} parent=27 // pred_fallthru
            _
          %327 = vnop
        $region28: #{patch_merging_v2.1} parent=23 // pred_fallthru
          _
        // Predicated region
        $region66: #{patch_merging_v2.1} parent=23 // pred_check
          %p328 = pneg %p96
        $region67: #{patch_merging_v2.1} parent=23 // pred_check_branch
          %330 = sbr.rel (%p328) target = $region69
        $region68: #{patch_merging_v2.1} parent=23 // pred_region
          %s331 = sand.u32 %s86, 1
          %s332 = sand.u32 %s86, 1
          %s333 = smul.addr %s332, 12
          %s334 = scalar_lea.vmem [#allocation3], %s333
          %s335 = smul.u32 3, %s21
          %s336 = sadd.s32 %s22, 1
          %s337 = smul.addr %s335, 2
          %s338 = sadd.s32 %s336, %s337
          %s339 = smul.addr %s20, 12
          %s340 = sadd.s32 %s338, %s339
          %s341 = smul.addr %s19, 36
          %s342 = sadd.s32 %s340, %s341
          %s343 = smul.addr %s342, 4
          %s344 = scalar_lea.vmem %s1, %s343
          // Predicated region
          $region70: #{patch_merging_v2.1} parent=68 // pred_check
            _
          $region71: #{patch_merging_v2.1} parent=68 // pred_check_branch
            %346 = sbr.rel (0) target = $region73
          $region72: #{patch_merging_v2.1} parent=68 // pred_region
            // Predicated region
            $region74: #{patch_merging_v2.1} parent=72 // pred_check
              _
            $region75: #{patch_merging_v2.1} parent=72 // pred_check_branch
              %348 = sbr.rel target = $region77
            $region76: #{patch_merging_v2.1} parent=72 // pred_region
              // Predicated region
              $region89: #{patch_merging_v2.1} parent=76 // pred_check
                _
              $region90: #{patch_merging_v2.1} parent=76 // pred_check_branch
                %367 = sbr.rel (0) target = $region92
              $region91: #{patch_merging_v2.1} parent=76 // pred_region
                loop: start=0, step=1, limit=1
                $region93: #{patch_merging_v2.1} parent=91 // loop_pre_header
                  _
                $region94: #{patch_merging_v2.1} parent=91 // loop_header
                  %s369 = sphi 0, %s373
                  %p370 = scmp.ge.s32.totalorder %s369, 1
                  %s374 = sphi %s344, %s344
                  %s375 = sphi %s334, %s334
                $region95: #{patch_merging_v2.1} parent=91 // loop_header_branch
                  %372 = sbr.rel (%p370) target = $region99
                $region96: #{patch_merging_v2.1} parent=91 // loop_body
                  _
                $region97: #{patch_merging_v2.1} parent=91 // loop_footer
                  %s373 = sadd.s32 1, %s369
                $region98: #{patch_merging_v2.1} parent=91 // loop_footer_branch
                  %368 = sbr.rel target = $region94
                $region99: #{patch_merging_v2.1} parent=91 // loop_exit
                  _
                loop: start=0, step=1, limit=1
                $region100: #{patch_merging_v2.1} parent=91 // loop_pre_header
                  _
                $region101: #{patch_merging_v2.1} parent=91 // loop_header
                  %s378 = sphi 0, %s382
                  %p379 = scmp.ge.s32.totalorder %s378, 1
                  %s383 = sphi %s344, %s344
                  %s384 = sphi %s334, %s334
                $region102: #{patch_merging_v2.1} parent=91 // loop_header_branch
                  %381 = sbr.rel (%p379) target = $region106
                $region103: #{patch_merging_v2.1} parent=91 // loop_body
                  %v385 = vld [vmem:[%s383] sm:$0xf]
                  %386 = vst [vmem:[%s384] sm:$0xf] %v385
                  %v387 = vld [vmem:[%s383 + $0x8] sm:$0xf]
                  %388 = vst [vmem:[%s384 + $0x4] sm:$0xf] %v387
                  %v389 = vld [vmem:[%s383 + $0x10] sm:$0xf]
                  %390 = vst [vmem:[%s384 + $0x8] sm:$0xf] %v389
                $region104: #{patch_merging_v2.1} parent=91 // loop_footer
                  %s382 = sadd.s32 1, %s378
                $region105: #{patch_merging_v2.1} parent=91 // loop_footer_branch
                  %377 = sbr.rel target = $region101
                $region106: #{patch_merging_v2.1} parent=91 // loop_exit
                  _
              $region92: #{patch_merging_v2.1} parent=76 // pred_fallthru
                _
            $region77: #{patch_merging_v2.1} parent=72 // pred_fallthru
              _
            // Predicated region
            $region78: #{patch_merging_v2.1} parent=72 // pred_check
              _
            $region79: #{patch_merging_v2.1} parent=72 // pred_check_branch
              %350 = sbr.rel (0) target = $region81
            $region80: #{patch_merging_v2.1} parent=72 // pred_region
              loop: start=0, step=1, limit=1
              $region82: #{patch_merging_v2.1} parent=80 // loop_pre_header
                _
              $region83: #{patch_merging_v2.1} parent=80 // loop_header
                %s353 = sphi 0, %s357
                %p354 = scmp.ge.s32.totalorder %s353, 1
                %s358 = sphi %s344, %s344
                %s359 = sphi %s334, %s334
              $region84: #{patch_merging_v2.1} parent=80 // loop_header_branch
                %356 = sbr.rel (%p354) target = $region88
              $region85: #{patch_merging_v2.1} parent=80 // loop_body
                %v360 = vld [vmem:[%s358] sm:$0xf]
                %361 = vst [vmem:[%s359] sm:$0xf] %v360
                %v362 = vld [vmem:[%s358 + $0x8] sm:$0xf]
                %363 = vst [vmem:[%s359 + $0x4] sm:$0xf] %v362
                %v364 = vld [vmem:[%s358 + $0x10] sm:$0xf]
                %365 = vst [vmem:[%s359 + $0x8] sm:$0xf] %v364
              $region86: #{patch_merging_v2.1} parent=80 // loop_footer
                %s357 = sadd.s32 1, %s353
              $region87: #{patch_merging_v2.1} parent=80 // loop_footer_branch
                %352 = sbr.rel target = $region83
              $region88: #{patch_merging_v2.1} parent=80 // loop_exit
                _
            $region81: #{patch_merging_v2.1} parent=72 // pred_fallthru
              _
          $region73: #{patch_merging_v2.1} parent=68 // pred_fallthru
            _
          %391 = vnop
        $region69: #{patch_merging_v2.1} parent=23 // pred_fallthru
          _
        // Predicated region
        $region107: #{patch_merging_v2.1} parent=23 // pred_check
          %p392 = pneg %p128
        $region108: #{patch_merging_v2.1} parent=23 // pred_check_branch
          %394 = sbr.rel (%p392) target = $region110
        $region109: #{patch_merging_v2.1} parent=23 // pred_region
          %s395 = sand.u32 %s118, 1
          %s396 = sand.u32 %s118, 1
          %s397 = smul.addr %s396, 12
          %s398 = scalar_lea.vmem [#allocation4], %s397
          %s399 = smul.u32 3, %s21
          %s400 = smul.addr %s399, 2
          %s401 = sadd.s32 %s22, %s400
          %s402 = sadd.s32 %s401, 6
          %s403 = smul.addr %s20, 12
          %s404 = sadd.s32 %s402, %s403
          %s405 = smul.addr %s19, 36
          %s406 = sadd.s32 %s404, %s405
          %s407 = smul.addr %s406, 4
          %s408 = scalar_lea.vmem %s2, %s407
          // Predicated region
          $region111: #{patch_merging_v2.1} parent=109 // pred_check
            _
          $region112: #{patch_merging_v2.1} parent=109 // pred_check_branch
            %410 = sbr.rel (0) target = $region114
          $region113: #{patch_merging_v2.1} parent=109 // pred_region
            // Predicated region
            $region115: #{patch_merging_v2.1} parent=113 // pred_check
              _
            $region116: #{patch_merging_v2.1} parent=113 // pred_check_branch
              %412 = sbr.rel target = $region118
            $region117: #{patch_merging_v2.1} parent=113 // pred_region
              // Predicated region
              $region130: #{patch_merging_v2.1} parent=117 // pred_check
                _
              $region131: #{patch_merging_v2.1} parent=117 // pred_check_branch
                %431 = sbr.rel (0) target = $region133
              $region132: #{patch_merging_v2.1} parent=117 // pred_region
                loop: start=0, step=1, limit=1
                $region134: #{patch_merging_v2.1} parent=132 // loop_pre_header
                  _
                $region135: #{patch_merging_v2.1} parent=132 // loop_header
                  %s433 = sphi 0, %s437
                  %p434 = scmp.ge.s32.totalorder %s433, 1
                  %s438 = sphi %s408, %s408
                  %s439 = sphi %s398, %s398
                $region136: #{patch_merging_v2.1} parent=132 // loop_header_branch
                  %436 = sbr.rel (%p434) target = $region140
                $region137: #{patch_merging_v2.1} parent=132 // loop_body
                  _
                $region138: #{patch_merging_v2.1} parent=132 // loop_footer
                  %s437 = sadd.s32 1, %s433
                $region139: #{patch_merging_v2.1} parent=132 // loop_footer_branch
                  %432 = sbr.rel target = $region135
                $region140: #{patch_merging_v2.1} parent=132 // loop_exit
                  _
                loop: start=0, step=1, limit=1
                $region141: #{patch_merging_v2.1} parent=132 // loop_pre_header
                  _
                $region142: #{patch_merging_v2.1} parent=132 // loop_header
                  %s442 = sphi 0, %s446
                  %p443 = scmp.ge.s32.totalorder %s442, 1
                  %s447 = sphi %s408, %s408
                  %s448 = sphi %s398, %s398
                $region143: #{patch_merging_v2.1} parent=132 // loop_header_branch
                  %445 = sbr.rel (%p443) target = $region147
                $region144: #{patch_merging_v2.1} parent=132 // loop_body
                  %v449 = vld [vmem:[%s447] sm:$0xf]
                  %450 = vst [vmem:[%s448] sm:$0xf] %v449
                  %v451 = vld [vmem:[%s447 + $0x8] sm:$0xf]
                  %452 = vst [vmem:[%s448 + $0x4] sm:$0xf] %v451
                  %v453 = vld [vmem:[%s447 + $0x10] sm:$0xf]
                  %454 = vst [vmem:[%s448 + $0x8] sm:$0xf] %v453
                $region145: #{patch_merging_v2.1} parent=132 // loop_footer
                  %s446 = sadd.s32 1, %s442
                $region146: #{patch_merging_v2.1} parent=132 // loop_footer_branch
                  %441 = sbr.rel target = $region142
                $region147: #{patch_merging_v2.1} parent=132 // loop_exit
                  _
              $region133: #{patch_merging_v2.1} parent=117 // pred_fallthru
                _
            $region118: #{patch_merging_v2.1} parent=113 // pred_fallthru
              _
            // Predicated region
            $region119: #{patch_merging_v2.1} parent=113 // pred_check
              _
            $region120: #{patch_merging_v2.1} parent=113 // pred_check_branch
              %414 = sbr.rel (0) target = $region122
            $region121: #{patch_merging_v2.1} parent=113 // pred_region
              loop: start=0, step=1, limit=1
              $region123: #{patch_merging_v2.1} parent=121 // loop_pre_header
                _
              $region124: #{patch_merging_v2.1} parent=121 // loop_header
                %s417 = sphi 0, %s421
                %p418 = scmp.ge.s32.totalorder %s417, 1
                %s422 = sphi %s408, %s408
                %s423 = sphi %s398, %s398
              $region125: #{patch_merging_v2.1} parent=121 // loop_header_branch
                %420 = sbr.rel (%p418) target = $region129
              $region126: #{patch_merging_v2.1} parent=121 // loop_body
                %v424 = vld [vmem:[%s422] sm:$0xf]
                %425 = vst [vmem:[%s423] sm:$0xf] %v424
                %v426 = vld [vmem:[%s422 + $0x8] sm:$0xf]
                %427 = vst [vmem:[%s423 + $0x4] sm:$0xf] %v426
                %v428 = vld [vmem:[%s422 + $0x10] sm:$0xf]
                %429 = vst [vmem:[%s423 + $0x8] sm:$0xf] %v428
              $region127: #{patch_merging_v2.1} parent=121 // loop_footer
                %s421 = sadd.s32 1, %s417
              $region128: #{patch_merging_v2.1} parent=121 // loop_footer_branch
                %416 = sbr.rel target = $region124
              $region129: #{patch_merging_v2.1} parent=121 // loop_exit
                _
            $region122: #{patch_merging_v2.1} parent=113 // pred_fallthru
              _
          $region114: #{patch_merging_v2.1} parent=109 // pred_fallthru
            _
          %455 = vnop
        $region110: #{patch_merging_v2.1} parent=23 // pred_fallthru
          _
        // Predicated region
        $region148: #{patch_merging_v2.1} parent=23 // pred_check
          %p456 = pneg %p160
        $region149: #{patch_merging_v2.1} parent=23 // pred_check_branch
          %458 = sbr.rel (%p456) target = $region151
        $region150: #{patch_merging_v2.1} parent=23 // pred_region
          %s459 = sand.u32 %s150, 1
          %s460 = sand.u32 %s150, 1
          %s461 = smul.addr %s460, 12
          %s462 = scalar_lea.vmem [#allocation5], %s461
          %s463 = smul.u32 3, %s21
          %s464 = sadd.s32 %s22, 1
          %s465 = smul.addr %s463, 2
          %s466 = sadd.s32 %s464, %s465
          %s467 = sadd.s32 %s466, 6
          %s468 = smul.addr %s20, 12
          %s469 = sadd.s32 %s467, %s468
          %s470 = smul.addr %s19, 36
          %s471 = sadd.s32 %s469, %s470
          %s472 = smul.addr %s471, 4
          %s473 = scalar_lea.vmem %s3, %s472
          // Predicated region
          $region152: #{patch_merging_v2.1} parent=150 // pred_check
            _
          $region153: #{patch_merging_v2.1} parent=150 // pred_check_branch
            %475 = sbr.rel (0) target = $region155
          $region154: #{patch_merging_v2.1} parent=150 // pred_region
            // Predicated region
            $region156: #{patch_merging_v2.1} parent=154 // pred_check
              _
            $region157: #{patch_merging_v2.1} parent=154 // pred_check_branch
              %477 = sbr.rel target = $region159
            $region158: #{patch_merging_v2.1} parent=154 // pred_region
              // Predicated region
              $region171: #{patch_merging_v2.1} parent=158 // pred_check
                _
              $region172: #{patch_merging_v2.1} parent=158 // pred_check_branch
                %496 = sbr.rel (0) target = $region174
              $region173: #{patch_merging_v2.1} parent=158 // pred_region
                loop: start=0, step=1, limit=1
                $region175: #{patch_merging_v2.1} parent=173 // loop_pre_header
                  _
                $region176: #{patch_merging_v2.1} parent=173 // loop_header
                  %s498 = sphi 0, %s502
                  %p499 = scmp.ge.s32.totalorder %s498, 1
                  %s503 = sphi %s473, %s473
                  %s504 = sphi %s462, %s462
                $region177: #{patch_merging_v2.1} parent=173 // loop_header_branch
                  %501 = sbr.rel (%p499) target = $region181
                $region178: #{patch_merging_v2.1} parent=173 // loop_body
                  _
                $region179: #{patch_merging_v2.1} parent=173 // loop_footer
                  %s502 = sadd.s32 1, %s498
                $region180: #{patch_merging_v2.1} parent=173 // loop_footer_branch
                  %497 = sbr.rel target = $region176
                $region181: #{patch_merging_v2.1} parent=173 // loop_exit
                  _
                loop: start=0, step=1, limit=1
                $region182: #{patch_merging_v2.1} parent=173 // loop_pre_header
                  _
                $region183: #{patch_merging_v2.1} parent=173 // loop_header
                  %s507 = sphi 0, %s511
                  %p508 = scmp.ge.s32.totalorder %s507, 1
                  %s512 = sphi %s473, %s473
                  %s513 = sphi %s462, %s462
                $region184: #{patch_merging_v2.1} parent=173 // loop_header_branch
                  %510 = sbr.rel (%p508) target = $region188
                $region185: #{patch_merging_v2.1} parent=173 // loop_body
                  %v514 = vld [vmem:[%s512] sm:$0xf]
                  %515 = vst [vmem:[%s513] sm:$0xf] %v514
                  %v516 = vld [vmem:[%s512 + $0x8] sm:$0xf]
                  %517 = vst [vmem:[%s513 + $0x4] sm:$0xf] %v516
                  %v518 = vld [vmem:[%s512 + $0x10] sm:$0xf]
                  %519 = vst [vmem:[%s513 + $0x8] sm:$0xf] %v518
                $region186: #{patch_merging_v2.1} parent=173 // loop_footer
                  %s511 = sadd.s32 1, %s507
                $region187: #{patch_merging_v2.1} parent=173 // loop_footer_branch
                  %506 = sbr.rel target = $region183
                $region188: #{patch_merging_v2.1} parent=173 // loop_exit
                  _
              $region174: #{patch_merging_v2.1} parent=158 // pred_fallthru
                _
            $region159: #{patch_merging_v2.1} parent=154 // pred_fallthru
              _
            // Predicated region
            $region160: #{patch_merging_v2.1} parent=154 // pred_check
              _
            $region161: #{patch_merging_v2.1} parent=154 // pred_check_branch
              %479 = sbr.rel (0) target = $region163
            $region162: #{patch_merging_v2.1} parent=154 // pred_region
              loop: start=0, step=1, limit=1
              $region164: #{patch_merging_v2.1} parent=162 // loop_pre_header
                _
              $region165: #{patch_merging_v2.1} parent=162 // loop_header
                %s482 = sphi 0, %s486
                %p483 = scmp.ge.s32.totalorder %s482, 1
                %s487 = sphi %s473, %s473
                %s488 = sphi %s462, %s462
              $region166: #{patch_merging_v2.1} parent=162 // loop_header_branch
                %485 = sbr.rel (%p483) target = $region170
              $region167: #{patch_merging_v2.1} parent=162 // loop_body
                %v489 = vld [vmem:[%s487] sm:$0xf]
                %490 = vst [vmem:[%s488] sm:$0xf] %v489
                %v491 = vld [vmem:[%s487 + $0x8] sm:$0xf]
                %492 = vst [vmem:[%s488 + $0x4] sm:$0xf] %v491
                %v493 = vld [vmem:[%s487 + $0x10] sm:$0xf]
                %494 = vst [vmem:[%s488 + $0x8] sm:$0xf] %v493
              $region168: #{patch_merging_v2.1} parent=162 // loop_footer
                %s486 = sadd.s32 1, %s482
              $region169: #{patch_merging_v2.1} parent=162 // loop_footer_branch
                %481 = sbr.rel target = $region165
              $region170: #{patch_merging_v2.1} parent=162 // loop_exit
                _
            $region163: #{patch_merging_v2.1} parent=154 // pred_fallthru
              _
          $region155: #{patch_merging_v2.1} parent=150 // pred_fallthru
            _
          %520 = vnop
        $region151: #{patch_merging_v2.1} parent=23 // pred_fallthru
          _
      $region24: #{patch_merging_v2.1} parent=5 // pred_fallthru
        _
      %p521 = scmp.le.s32.totalorder 1, %s12
      %p522 = scmp.lt.s32.totalorder %s12, 7
      %p523 = pnand %p521, %p522
      %p524 = pneg %p523
      // Predicated region
      $region189: #{patch_merging_v2.1} parent=5 // pred_check
        _
      $region190: #{patch_merging_v2.1} parent=5 // pred_check_branch
        %526 = sbr.rel (%p523) target = $region192
      $region191: #{patch_merging_v2.1} parent=5 // pred_region
        %s527 = ssub.s32 %s12, 1
        %s528 = sand.u32 %s57, 1
        %s529 = sand.u32 %s57, 1
        %s530 = smul.addr %s529, 12
        %s531 = scalar_lea.vmem [#allocation2], %s530
        // Predicated region
        $region193: #{patch_merging_v2.1} parent=191 // pred_check
          %p532 = pneg %p70
        $region194: #{patch_merging_v2.1} parent=191 // pred_check_branch
          %534 = sbr.rel (%p532) target = $region196
        $region195: #{patch_merging_v2.1} parent=191 // pred_region
          _
        $region196: #{patch_merging_v2.1} parent=191 // pred_fallthru
          _
        %s535 = sand.u32 %s89, 1
        %s536 = sand.u32 %s89, 1
        %s537 = smul.addr %s536, 12
        %s538 = scalar_lea.vmem [#allocation3], %s537
        // Predicated region
        $region197: #{patch_merging_v2.1} parent=191 // pred_check
          %p539 = pneg %p102
        $region198: #{patch_merging_v2.1} parent=191 // pred_check_branch
          %541 = sbr.rel (%p539) target = $region200
        $region199: #{patch_merging_v2.1} parent=191 // pred_region
          _
        $region200: #{patch_merging_v2.1} parent=191 // pred_fallthru
          _
        %s542 = sand.u32 %s121, 1
        %s543 = sand.u32 %s121, 1
        %s544 = smul.addr %s543, 12
        %s545 = scalar_lea.vmem [#allocation4], %s544
        // Predicated region
        $region201: #{patch_merging_v2.1} parent=191 // pred_check
          %p546 = pneg %p134
        $region202: #{patch_merging_v2.1} parent=191 // pred_check_branch
          %548 = sbr.rel (%p546) target = $region204
        $region203: #{patch_merging_v2.1} parent=191 // pred_region
          _
        $region204: #{patch_merging_v2.1} parent=191 // pred_fallthru
          _
        %s549 = sand.u32 %s153, 1
        %s550 = sand.u32 %s153, 1
        %s551 = smul.addr %s550, 12
        %s552 = scalar_lea.vmem [#allocation5], %s551
        // Predicated region
        $region205: #{patch_merging_v2.1} parent=191 // pred_check
          %p553 = pneg %p166
        $region206: #{patch_merging_v2.1} parent=191 // pred_check_branch
          %555 = sbr.rel (%p553) target = $region208
        $region207: #{patch_merging_v2.1} parent=191 // pred_region
          _
        $region208: #{patch_merging_v2.1} parent=191 // pred_fallthru
          _
        %s556 = sand.u32 %s57, 1
        %s557 = sand.u32 %s57, 1
        %s558 = smul.addr %s557, 12
        %s559 = scalar_lea.vmem [#allocation2], %s558
        %p560 = pneg %p70
        %p561 = pneg %p67
        %s562 = sand.u32 %s89, 1
        %s563 = sand.u32 %s89, 1
        %s564 = smul.addr %s563, 12
        %s565 = scalar_lea.vmem [#allocation3], %s564
        %p566 = pneg %p102
        %p567 = pneg %p99
        %s568 = sand.u32 %s121, 1
        %s569 = sand.u32 %s121, 1
        %s570 = smul.addr %s569, 12
        %s571 = scalar_lea.vmem [#allocation4], %s570
        %p572 = pneg %p134
        %p573 = pneg %p131
        %s574 = sand.u32 %s153, 1
        %s575 = sand.u32 %s153, 1
        %s576 = smul.addr %s575, 12
        %s577 = scalar_lea.vmem [#allocation5], %s576
        %p578 = pneg %p166
        %p579 = pneg %p163
        %p580 = pneg %p187
        %p581 = pneg %p184
        %p582 = pneg %p208
        %p583 = pneg %p205
        %p584 = pneg %p240
        %p585 = pneg %p237
        %s586 = smul.u32 3, %s25
        %p587 = scmp.lt.s32.totalorder %s23, 1
        %s588 = scalar_select %p587, %s23, 1
        %p589 = scmp.lt.s32.totalorder %s24, 2
        %s590 = scalar_select %p589, %s24, 2
        %p591 = scmp.lt.s32.totalorder %s586, 2
        %s592 = scalar_select %p591, %s586, 2
        %p593 = scmp.lt.s32.totalorder %s26, 0
        %s594 = scalar_select %p593, %s26, 0
        %s595 = sadd.s32 %s594, %s592
        %s596 = smul.addr %s590, 3
        %s597 = sadd.s32 %s595, %s596
        %s598 = smul.addr %s588, 9
        %s599 = sadd.s32 %s597, %s598
        %s600 = smul.addr %s599, 4
        %s601 = scalar_lea.vmem %s6, %s600
        %s602 = smul.u32 3, %s25
        %s603 = smul.u32 3, %s25
        %s604 = smul.u32 3, %s25
        %s605 = smul.u32 3, %s25
        %s606 = smul.u32 3, %s25
        %p607 = scmp.lt.s32.totalorder %s23, 1
        %s608 = scalar_select %p607, %s23, 1
        %p609 = scmp.lt.s32.totalorder %s24, 2
        %s610 = scalar_select %p609, %s24, 2
        %p611 = scmp.lt.s32.totalorder %s606, 2
        %s612 = scalar_select %p611, %s606, 2
        %p613 = scmp.lt.s32.totalorder %s26, 0
        %s614 = scalar_select %p613, %s26, 0
        %s615 = sadd.s32 %s614, %s612
        %s616 = smul.addr %s610, 3
        %s617 = sadd.s32 %s615, %s616
        %s618 = smul.addr %s608, 9
        %s619 = sadd.s32 %s617, %s618
        %s620 = smul.addr %s619, 4
        %s621 = scalar_lea.vmem %s6, %s620
        %s622 = smul.u32 3, %s25
        %v623 = vld [vmem:[%s4] sm:$0xff]
        %v624 = vld [vmem:[%s4 + $0x8] sm:$0xff]
        %v625 = vld [vmem:[%s4 + $0x10] sm:$0xff]
        %v626 = vld [vmem:[%s4 + $0x18] sm:$0xff]
        %v627 = vld [vmem:[%s4 + $0x20] sm:$0xff]
        %v628 = vld [vmem:[%s4 + $0x28] sm:$0xff]
        %v629 = vld [vmem:[%s4 + $0x30] sm:$0xff]
        %v630 = vld [vmem:[%s4 + $0x38] sm:$0xff]
        %v631 = vld [vmem:[%s4 + $0x40] sm:$0xff]
        %v632 = vld [vmem:[%s4 + $0x48] sm:$0xff]
        %v633 = vld [vmem:[%s4 + $0x50] sm:$0xff]
        %v634 = vld [vmem:[%s4 + $0x58] sm:$0xff]
        %v635 = vld [vmem:[%s4 + $0x60] sm:$0xff]
        %v636 = vld [vmem:[%s4 + $0x68] sm:$0xff]
        %v637 = vld [vmem:[%s4 + $0x70] sm:$0xff]
        %v638 = vld [vmem:[%s4 + $0x78] sm:$0xff]
        %v639 = vld [vmem:[%s5] sm:$0x1]
        %v640 = vld [vmem:[%s5 + $0x1] sm:$0x1]
        %v641 = vld [vmem:[%s531] sm:$0x7]
        %v642 = vld [vmem:[%s538] sm:$0x7]
        %v643 = vld [vmem:[%s545] sm:$0x7]
        %v644 = vld [vmem:[%s552] sm:$0x7]
        %vm645 = vcmask 256000
        %v646 = vsel %vm645, %v641, 0.0
        %647 = vadd.xlane.f32.xlu0 %v646
        %v648 = vpop.xlane.xlu0 %647
        %v649 = vmul.f32 %v641, %v641
        %v650 = vsel %vm645, %v649, 0.0
        %651 = vadd.xlane.f32.xlu0 %v650
        %v652 = vpop.xlane.xlu0 %651
        %v653 = vsel %vm645, %v642, 0.0
        %654 = vadd.xlane.f32.xlu0 %v653
        %v655 = vpop.xlane.xlu0 %654
        %v656 = vmul.f32 %v642, %v642
        %v657 = vsel %vm645, %v656, 0.0
        %658 = vadd.xlane.f32.xlu0 %v657
        %v659 = vpop.xlane.xlu0 %658
        %vm660 = vcmask 261120
        %v662 = vsel %vm660, %v642, 0
        %664 = vmatprep.subr.mxu0 0.0
        %665 = vmatpush1.msra.mxu0 %v627
        %666 = vmatprep.subr.mxu0 0.0
        %667 = vmatpush1.msra.mxu0 %v628
        %668 = vmatprep.subr.mxu0 0.0
        %669 = vmatpush1.msra.mxu0 %v629
        %670 = vmatprep.subr.mxu0 0.0
        %671 = vmatpush1.msra.mxu0 %v630
        %672 = vmatprep.subr.mxu0 0.0
        %673 = vmatpush1.msra.mxu0 0.0
        %674 = vmatprep.subr.mxu0 0.0
        %675 = vmatpush1.msra.mxu0 0.0
        %676 = vmatprep.subr.mxu0 0.0
        %677 = vmatpush1.msra.mxu0 0.0
        %678 = vmatprep.subr.mxu0 0.0
        %679 = vmatpush1.msra.mxu0 0.0
        %680 = vmatprep.subr.mxu0 0.0
        %681 = vmatpush1.msra.mxu0 0.0
        %682 = vmatprep.subr.mxu0 0.0
        %683 = vmatpush1.msra.mxu0 0.0
        %684 = vmatprep.subr.mxu0 0.0
        %685 = vmatpush1.msra.mxu0 0.0
        %686 = vmatprep.subr.mxu0 0.0
        %687 = vmatpush1.msra.mxu0 0.0
        %688 = vmatprep.subr.mxu0 0.0
        %689 = vmatpush1.msra.mxu0 0.0
        %690 = vmatprep.subr.mxu0 0.0
        %691 = vmatpush1.msra.mxu0 0.0
        %692 = vmatprep.subr.mxu0 0.0
        %693 = vmatpush1.msra.mxu0 0.0
        %694 = vmatprep.subr.mxu0 0.0
        %695 = vmatpush1.msra.mxu0 0.0
        %696 = vmatprep.subr.mxu0 0.0
        %697 = vmatpush1.msra.mxu0 0.0
        %698 = vmatprep.subr.mxu0 0.0
        %699 = vmatpush1.msra.mxu0 0.0
        %700 = vmatprep.subr.mxu0 0.0
        %701 = vmatpush1.msra.mxu0 0.0
        %702 = vmatprep.subr.mxu0 0.0
        %703 = vmatpush1.msra.mxu0 0.0
        %704 = vmatprep.subr.mxu0 0.0
        %705 = vmatpush1.msra.mxu0 0.0
        %706 = vmatprep.subr.mxu0 0.0
        %707 = vmatpush1.msra.mxu0 0.0
        %708 = vmatprep.subr.mxu0 0.0
        %709 = vmatpush1.msra.mxu0 0.0
        %710 = vmatprep.subr.mxu0 0.0
        %711 = vmatpush1.msra.mxu0 0.0
        %712 = vmatprep.subr.mxu0 0.0
        %713 = vmatpush1.msra.mxu0 0.0
        %714 = vmatprep.subr.mxu0 0.0
        %715 = vmatpush1.msra.mxu0 0.0
        %716 = vmatprep.subr.mxu0 0.0
        %717 = vmatpush1.msra.mxu0 0.0
        %718 = vmatprep.subr.mxu0 0.0
        %719 = vmatpush1.msra.mxu0 0.0
        %720 = vmatprep.subr.mxu0 0.0
        %721 = vmatpush1.msra.mxu0 0.0
        %722 = vmatprep.subr.mxu0 0.0
        %723 = vmatpush1.msra.mxu0 0.0
        %724 = vmatprep.subr.mxu0 0.0
        %725 = vmatpush1.msra.mxu0 0.0
        %726 = vmatprep.subr.mxu0 0.0
        %727 = vmatpush1.msra.mxu0 0.0
        %728 = vmatprep.mubr.f32.mxu0 0.0
        %729 = vmatmul.mubr.f32.gmra.mrb[0].mxu0 %v662
        %v730 = vpop.f32.mrb[0].mxu0
        %v731 = vadd.f32 0.0, %v730
        %v732 = vpop.f32.mrb[0].mxu0
        %733 = vdwg.mxu0
        %v734 = vadd.f32 %v648, %v655
        %v735 = vadd.f32 %v652, %v659
        %v737 = vsel %vm660, %v641, 0
        %739 = vmatprep.subr.mxu0 0.0
        %740 = vmatpush1.msra.mxu0 %v623
        %741 = vmatprep.subr.mxu0 0.0
        %742 = vmatpush1.msra.mxu0 %v624
        %743 = vmatprep.subr.mxu0 0.0
        %744 = vmatpush1.msra.mxu0 %v625
        %745 = vmatprep.subr.mxu0 0.0
        %746 = vmatpush1.msra.mxu0 %v626
        %747 = vmatprep.subr.mxu0 0.0
        %748 = vmatpush1.msra.mxu0 0.0
        %749 = vmatprep.subr.mxu0 0.0
        %750 = vmatpush1.msra.mxu0 0.0
        %751 = vmatprep.subr.mxu0 0.0
        %752 = vmatpush1.msra.mxu0 0.0
        %753 = vmatprep.subr.mxu0 0.0
        %754 = vmatpush1.msra.mxu0 0.0
        %755 = vmatprep.subr.mxu0 0.0
        %756 = vmatpush1.msra.mxu0 0.0
        %757 = vmatprep.subr.mxu0 0.0
        %758 = vmatpush1.msra.mxu0 0.0
        %759 = vmatprep.subr.mxu0 0.0
        %760 = vmatpush1.msra.mxu0 0.0
        %761 = vmatprep.subr.mxu0 0.0
        %762 = vmatpush1.msra.mxu0 0.0
        %763 = vmatprep.subr.mxu0 0.0
        %764 = vmatpush1.msra.mxu0 0.0
        %765 = vmatprep.subr.mxu0 0.0
        %766 = vmatpush1.msra.mxu0 0.0
        %767 = vmatprep.subr.mxu0 0.0
        %768 = vmatpush1.msra.mxu0 0.0
        %769 = vmatprep.subr.mxu0 0.0
        %770 = vmatpush1.msra.mxu0 0.0
        %771 = vmatprep.subr.mxu0 0.0
        %772 = vmatpush1.msra.mxu0 0.0
        %773 = vmatprep.subr.mxu0 0.0
        %774 = vmatpush1.msra.mxu0 0.0
        %775 = vmatprep.subr.mxu0 0.0
        %776 = vmatpush1.msra.mxu0 0.0
        %777 = vmatprep.subr.mxu0 0.0
        %778 = vmatpush1.msra.mxu0 0.0
        %779 = vmatprep.subr.mxu0 0.0
        %780 = vmatpush1.msra.mxu0 0.0
        %781 = vmatprep.subr.mxu0 0.0
        %782 = vmatpush1.msra.mxu0 0.0
        %783 = vmatprep.subr.mxu0 0.0
        %784 = vmatpush1.msra.mxu0 0.0
        %785 = vmatprep.subr.mxu0 0.0
        %786 = vmatpush1.msra.mxu0 0.0
        %787 = vmatprep.subr.mxu0 0.0
        %788 = vmatpush1.msra.mxu0 0.0
        %789 = vmatprep.subr.mxu0 0.0
        %790 = vmatpush1.msra.mxu0 0.0
        %791 = vmatprep.subr.mxu0 0.0
        %792 = vmatpush1.msra.mxu0 0.0
        %793 = vmatprep.subr.mxu0 0.0
        %794 = vmatpush1.msra.mxu0 0.0
        %795 = vmatprep.subr.mxu0 0.0
        %796 = vmatpush1.msra.mxu0 0.0
        %797 = vmatprep.subr.mxu0 0.0
        %798 = vmatpush1.msra.mxu0 0.0
        %799 = vmatprep.subr.mxu0 0.0
        %800 = vmatpush1.msra.mxu0 0.0
        %801 = vmatprep.subr.mxu0 0.0
        %802 = vmatpush1.msra.mxu0 0.0
        %803 = vmatprep.mubr.f32.mxu0 0.0
        %804 = vmatmul.mubr.f32.gmra.mrb[0].mxu0 %v737
        %v805 = vpop.f32.mrb[0].mxu0
        %v806 = vadd.f32 %v731, %v805
        %v807 = vpop.f32.mrb[0].mxu0
        %808 = vdwg.mxu0
        %v809 = vsel %vm645, %v643, 0.0
        %810 = vadd.xlane.f32.xlu0 %v809
        %v811 = vpop.xlane.xlu0 %810
        %v812 = vmul.f32 %v643, %v643
        %v813 = vsel %vm645, %v812, 0.0
        %814 = vadd.xlane.f32.xlu0 %v813
        %v815 = vpop.xlane.xlu0 %814
        %v817 = vsel %vm660, %v643, 0
        %819 = vmatprep.subr.mxu0 0.0
        %820 = vmatpush1.msra.mxu0 %v631
        %821 = vmatprep.subr.mxu0 0.0
        %822 = vmatpush1.msra.mxu0 %v632
        %823 = vmatprep.subr.mxu0 0.0
        %824 = vmatpush1.msra.mxu0 %v633
        %825 = vmatprep.subr.mxu0 0.0
        %826 = vmatpush1.msra.mxu0 %v634
        %827 = vmatprep.subr.mxu0 0.0
        %828 = vmatpush1.msra.mxu0 0.0
        %829 = vmatprep.subr.mxu0 0.0
        %830 = vmatpush1.msra.mxu0 0.0
        %831 = vmatprep.subr.mxu0 0.0
        %832 = vmatpush1.msra.mxu0 0.0
        %833 = vmatprep.subr.mxu0 0.0
        %834 = vmatpush1.msra.mxu0 0.0
        %835 = vmatprep.subr.mxu0 0.0
        %836 = vmatpush1.msra.mxu0 0.0
        %837 = vmatprep.subr.mxu0 0.0
        %838 = vmatpush1.msra.mxu0 0.0
        %839 = vmatprep.subr.mxu0 0.0
        %840 = vmatpush1.msra.mxu0 0.0
        %841 = vmatprep.subr.mxu0 0.0
        %842 = vmatpush1.msra.mxu0 0.0
        %843 = vmatprep.subr.mxu0 0.0
        %844 = vmatpush1.msra.mxu0 0.0
        %845 = vmatprep.subr.mxu0 0.0
        %846 = vmatpush1.msra.mxu0 0.0
        %847 = vmatprep.subr.mxu0 0.0
        %848 = vmatpush1.msra.mxu0 0.0
        %849 = vmatprep.subr.mxu0 0.0
        %850 = vmatpush1.msra.mxu0 0.0
        %851 = vmatprep.subr.mxu0 0.0
        %852 = vmatpush1.msra.mxu0 0.0
        %853 = vmatprep.subr.mxu0 0.0
        %854 = vmatpush1.msra.mxu0 0.0
        %855 = vmatprep.subr.mxu0 0.0
        %856 = vmatpush1.msra.mxu0 0.0
        %857 = vmatprep.subr.mxu0 0.0
        %858 = vmatpush1.msra.mxu0 0.0
        %859 = vmatprep.subr.mxu0 0.0
        %860 = vmatpush1.msra.mxu0 0.0
        %861 = vmatprep.subr.mxu0 0.0
        %862 = vmatpush1.msra.mxu0 0.0
        %863 = vmatprep.subr.mxu0 0.0
        %864 = vmatpush1.msra.mxu0 0.0
        %865 = vmatprep.subr.mxu0 0.0
        %866 = vmatpush1.msra.mxu0 0.0
        %867 = vmatprep.subr.mxu0 0.0
        %868 = vmatpush1.msra.mxu0 0.0
        %869 = vmatprep.subr.mxu0 0.0
        %870 = vmatpush1.msra.mxu0 0.0
        %871 = vmatprep.subr.mxu0 0.0
        %872 = vmatpush1.msra.mxu0 0.0
        %873 = vmatprep.subr.mxu0 0.0
        %874 = vmatpush1.msra.mxu0 0.0
        %875 = vmatprep.subr.mxu0 0.0
        %876 = vmatpush1.msra.mxu0 0.0
        %877 = vmatprep.subr.mxu0 0.0
        %878 = vmatpush1.msra.mxu0 0.0
        %879 = vmatprep.subr.mxu0 0.0
        %880 = vmatpush1.msra.mxu0 0.0
        %881 = vmatprep.subr.mxu0 0.0
        %882 = vmatpush1.msra.mxu0 0.0
        %883 = vmatprep.mubr.f32.mxu0 0.0
        %884 = vmatmul.mubr.f32.gmra.mrb[0].mxu0 %v817
        %v885 = vpop.f32.mrb[0].mxu0
        %v886 = vadd.f32 0.0, %v885
        %v887 = vpop.f32.mrb[0].mxu0
        %888 = vdwg.mxu0
        %v889 = vadd.f32 %v734, %v811
        %v890 = vadd.f32 %v735, %v815
        %v891 = vadd.f32 %v806, %v886
        %v892 = vsel %vm645, %v644, 0.0
        %893 = vadd.xlane.f32.xlu0 %v892
        %v894 = vpop.xlane.xlu0 %893
        %v895 = vmul.f32 %v644, %v644
        %v896 = vsel %vm645, %v895, 0.0
        %897 = vadd.xlane.f32.xlu0 %v896
        %v898 = vpop.xlane.xlu0 %897
        %v900 = vsel %vm660, %v644, 0
        %902 = vmatprep.subr.mxu0 0.0
        %903 = vmatpush1.msra.mxu0 %v635
        %904 = vmatprep.subr.mxu0 0.0
        %905 = vmatpush1.msra.mxu0 %v636
        %906 = vmatprep.subr.mxu0 0.0
        %907 = vmatpush1.msra.mxu0 %v637
        %908 = vmatprep.subr.mxu0 0.0
        %909 = vmatpush1.msra.mxu0 %v638
        %910 = vmatprep.subr.mxu0 0.0
        %911 = vmatpush1.msra.mxu0 0.0
        %912 = vmatprep.subr.mxu0 0.0
        %913 = vmatpush1.msra.mxu0 0.0
        %914 = vmatprep.subr.mxu0 0.0
        %915 = vmatpush1.msra.mxu0 0.0
        %916 = vmatprep.subr.mxu0 0.0
        %917 = vmatpush1.msra.mxu0 0.0
        %918 = vmatprep.subr.mxu0 0.0
        %919 = vmatpush1.msra.mxu0 0.0
        %920 = vmatprep.subr.mxu0 0.0
        %921 = vmatpush1.msra.mxu0 0.0
        %922 = vmatprep.subr.mxu0 0.0
        %923 = vmatpush1.msra.mxu0 0.0
        %924 = vmatprep.subr.mxu0 0.0
        %925 = vmatpush1.msra.mxu0 0.0
        %926 = vmatprep.subr.mxu0 0.0
        %927 = vmatpush1.msra.mxu0 0.0
        %928 = vmatprep.subr.mxu0 0.0
        %929 = vmatpush1.msra.mxu0 0.0
        %930 = vmatprep.subr.mxu0 0.0
        %931 = vmatpush1.msra.mxu0 0.0
        %932 = vmatprep.subr.mxu0 0.0
        %933 = vmatpush1.msra.mxu0 0.0
        %934 = vmatprep.subr.mxu0 0.0
        %935 = vmatpush1.msra.mxu0 0.0
        %936 = vmatprep.subr.mxu0 0.0
        %937 = vmatpush1.msra.mxu0 0.0
        %938 = vmatprep.subr.mxu0 0.0
        %939 = vmatpush1.msra.mxu0 0.0
        %940 = vmatprep.subr.mxu0 0.0
        %941 = vmatpush1.msra.mxu0 0.0
        %942 = vmatprep.subr.mxu0 0.0
        %943 = vmatpush1.msra.mxu0 0.0
        %944 = vmatprep.subr.mxu0 0.0
        %945 = vmatpush1.msra.mxu0 0.0
        %946 = vmatprep.subr.mxu0 0.0
        %947 = vmatpush1.msra.mxu0 0.0
        %948 = vmatprep.subr.mxu0 0.0
        %949 = vmatpush1.msra.mxu0 0.0
        %950 = vmatprep.subr.mxu0 0.0
        %951 = vmatpush1.msra.mxu0 0.0
        %952 = vmatprep.subr.mxu0 0.0
        %953 = vmatpush1.msra.mxu0 0.0
        %954 = vmatprep.subr.mxu0 0.0
        %955 = vmatpush1.msra.mxu0 0.0
        %956 = vmatprep.subr.mxu0 0.0
        %957 = vmatpush1.msra.mxu0 0.0
        %958 = vmatprep.subr.mxu0 0.0
        %959 = vmatpush1.msra.mxu0 0.0
        %960 = vmatprep.subr.mxu0 0.0
        %961 = vmatpush1.msra.mxu0 0.0
        %962 = vmatprep.subr.mxu0 0.0
        %963 = vmatpush1.msra.mxu0 0.0
        %964 = vmatprep.subr.mxu0 0.0
        %965 = vmatpush1.msra.mxu0 0.0
        %966 = vmatprep.mubr.f32.mxu0 0.0
        %967 = vmatmul.mubr.f32.gmra.mrb[0].mxu0 %v900
        %v968 = vpop.f32.mrb[0].mxu0
        %v969 = vadd.f32 0.0, %v968
        %v970 = vpop.f32.mrb[0].mxu0
        %971 = vdwg.mxu0
        %v972 = vadd.f32 %v889, %v894
        %v973 = vadd.f32 %v890, %v898
        %v974 = vadd.f32 %v891, %v969
        %v975 = vmul.f32 %v972, 0.0078125
        %v976 = vmul.f32 %v973, 0.0078125
        %v977 = vmul.f32 %v975, %v975
        %v978 = vsub.f32 %v976, %v977
        %v979 = vadd.f32 %v978, 1e-05
        %v980 = vrsqrt.pop %v979
        %v981 = vlaneseq
        %v982 = vshrl.u32 %v981, 7
        %v983 = vsub.s32 0, %v982
        %v984 = vrot.slane %v639, %v983
        %v985 = vmul.f32 %v975, %v984
        %v986 = vsub.f32 %v974, %v985
        %v987 = vmul.f32 %v986, %v980
        %v988 = vlaneseq
        %v989 = vshrl.u32 %v988, 7
        %v990 = vsub.s32 0, %v989
        %v991 = vrot.slane %v640, %v990
        %v992 = vadd.f32 %v987, %v991
        %993 = vst.msk [vmem:[%s621] sm:$0x7] %vm645, %v992
        %s994 = scalar_lea.vmem %s531, 4 [#allocation2]
        %v995 = vld [vmem:[%s994] sm:$0x7]
        %s996 = scalar_lea.vmem %s538, 4 [#allocation3]
        %v997 = vld [vmem:[%s996] sm:$0x7]
        %s998 = scalar_lea.vmem %s545, 4 [#allocation4]
        %v999 = vld [vmem:[%s998] sm:$0x7]
        %s1000 = scalar_lea.vmem %s552, 4 [#allocation5]
        %v1001 = vld [vmem:[%s1000] sm:$0x7]
        %v1002 = vsel %vm645, %v995, 0.0
        %1003 = vadd.xlane.f32.xlu0 %v1002
        %v1004 = vpop.xlane.xlu0 %1003
        %v1005 = vmul.f32 %v995, %v995
        %v1006 = vsel %vm645, %v1005, 0.0
        %1007 = vadd.xlane.f32.xlu0 %v1006
        %v1008 = vpop.xlane.xlu0 %1007
        %v1009 = vsel %vm645, %v997, 0.0
        %1010 = vadd.xlane.f32.xlu0 %v1009
        %v1011 = vpop.xlane.xlu0 %1010
        %v1012 = vmul.f32 %v997, %v997
        %v1013 = vsel %vm645, %v1012, 0.0
        %1014 = vadd.xlane.f32.xlu0 %v1013
        %v1015 = vpop.xlane.xlu0 %1014
        %v1017 = vsel %vm660, %v997, 0
        %1019 = vmatprep.subr.mxu0 0.0
        %1020 = vmatpush1.msra.mxu0 %v627
        %1021 = vmatprep.subr.mxu0 0.0
        %1022 = vmatpush1.msra.mxu0 %v628
        %1023 = vmatprep.subr.mxu0 0.0
        %1024 = vmatpush1.msra.mxu0 %v629
        %1025 = vmatprep.subr.mxu0 0.0
        %1026 = vmatpush1.msra.mxu0 %v630
        %1027 = vmatprep.subr.mxu0 0.0
        %1028 = vmatpush1.msra.mxu0 0.0
        %1029 = vmatprep.subr.mxu0 0.0
        %1030 = vmatpush1.msra.mxu0 0.0
        %1031 = vmatprep.subr.mxu0 0.0
        %1032 = vmatpush1.msra.mxu0 0.0
        %1033 = vmatprep.subr.mxu0 0.0
        %1034 = vmatpush1.msra.mxu0 0.0
        %1035 = vmatprep.subr.mxu0 0.0
        %1036 = vmatpush1.msra.mxu0 0.0
        %1037 = vmatprep.subr.mxu0 0.0
        %1038 = vmatpush1.msra.mxu0 0.0
        %1039 = vmatprep.subr.mxu0 0.0
        %1040 = vmatpush1.msra.mxu0 0.0
        %1041 = vmatprep.subr.mxu0 0.0
        %1042 = vmatpush1.msra.mxu0 0.0
        %1043 = vmatprep.subr.mxu0 0.0
        %1044 = vmatpush1.msra.mxu0 0.0
        %1045 = vmatprep.subr.mxu0 0.0
        %1046 = vmatpush1.msra.mxu0 0.0
        %1047 = vmatprep.subr.mxu0 0.0
        %1048 = vmatpush1.msra.mxu0 0.0
        %1049 = vmatprep.subr.mxu0 0.0
        %1050 = vmatpush1.msra.mxu0 0.0
        %1051 = vmatprep.subr.mxu0 0.0
        %1052 = vmatpush1.msra.mxu0 0.0
        %1053 = vmatprep.subr.mxu0 0.0
        %1054 = vmatpush1.msra.mxu0 0.0
        %1055 = vmatprep.subr.mxu0 0.0
        %1056 = vmatpush1.msra.mxu0 0.0
        %1057 = vmatprep.subr.mxu0 0.0
        %1058 = vmatpush1.msra.mxu0 0.0
        %1059 = vmatprep.subr.mxu0 0.0
        %1060 = vmatpush1.msra.mxu0 0.0
        %1061 = vmatprep.subr.mxu0 0.0
        %1062 = vmatpush1.msra.mxu0 0.0
        %1063 = vmatprep.subr.mxu0 0.0
        %1064 = vmatpush1.msra.mxu0 0.0
        %1065 = vmatprep.subr.mxu0 0.0
        %1066 = vmatpush1.msra.mxu0 0.0
        %1067 = vmatprep.subr.mxu0 0.0
        %1068 = vmatpush1.msra.mxu0 0.0
        %1069 = vmatprep.subr.mxu0 0.0
        %1070 = vmatpush1.msra.mxu0 0.0
        %1071 = vmatprep.subr.mxu0 0.0
        %1072 = vmatpush1.msra.mxu0 0.0
        %1073 = vmatprep.subr.mxu0 0.0
        %1074 = vmatpush1.msra.mxu0 0.0
        %1075 = vmatprep.subr.mxu0 0.0
        %1076 = vmatpush1.msra.mxu0 0.0
        %1077 = vmatprep.subr.mxu0 0.0
        %1078 = vmatpush1.msra.mxu0 0.0
        %1079 = vmatprep.subr.mxu0 0.0
        %1080 = vmatpush1.msra.mxu0 0.0
        %1081 = vmatprep.subr.mxu0 0.0
        %1082 = vmatpush1.msra.mxu0 0.0
        %1083 = vmatprep.mubr.f32.mxu0 0.0
        %1084 = vmatmul.mubr.f32.gmra.mrb[0].mxu0 %v1017
        %v1085 = vpop.f32.mrb[0].mxu0
        %v1086 = vadd.f32 0.0, %v1085
        %v1087 = vpop.f32.mrb[0].mxu0
        %1088 = vdwg.mxu0
        %v1089 = vadd.f32 %v1004, %v1011
        %v1090 = vadd.f32 %v1008, %v1015
        %v1092 = vsel %vm660, %v995, 0
        %1094 = vmatprep.subr.mxu0 0.0
        %1095 = vmatpush1.msra.mxu0 %v623
        %1096 = vmatprep.subr.mxu0 0.0
        %1097 = vmatpush1.msra.mxu0 %v624
        %1098 = vmatprep.subr.mxu0 0.0
        %1099 = vmatpush1.msra.mxu0 %v625
        %1100 = vmatprep.subr.mxu0 0.0
        %1101 = vmatpush1.msra.mxu0 %v626
        %1102 = vmatprep.subr.mxu0 0.0
        %1103 = vmatpush1.msra.mxu0 0.0
        %1104 = vmatprep.subr.mxu0 0.0
        %1105 = vmatpush1.msra.mxu0 0.0
        %1106 = vmatprep.subr.mxu0 0.0
        %1107 = vmatpush1.msra.mxu0 0.0
        %1108 = vmatprep.subr.mxu0 0.0
        %1109 = vmatpush1.msra.mxu0 0.0
        %1110 = vmatprep.subr.mxu0 0.0
        %1111 = vmatpush1.msra.mxu0 0.0
        %1112 = vmatprep.subr.mxu0 0.0
        %1113 = vmatpush1.msra.mxu0 0.0
        %1114 = vmatprep.subr.mxu0 0.0
        %1115 = vmatpush1.msra.mxu0 0.0
        %1116 = vmatprep.subr.mxu0 0.0
        %1117 = vmatpush1.msra.mxu0 0.0
        %1118 = vmatprep.subr.mxu0 0.0
        %1119 = vmatpush1.msra.mxu0 0.0
        %1120 = vmatprep.subr.mxu0 0.0
        %1121 = vmatpush1.msra.mxu0 0.0
        %1122 = vmatprep.subr.mxu0 0.0
        %1123 = vmatpush1.msra.mxu0 0.0
        %1124 = vmatprep.subr.mxu0 0.0
        %1125 = vmatpush1.msra.mxu0 0.0
        %1126 = vmatprep.subr.mxu0 0.0
        %1127 = vmatpush1.msra.mxu0 0.0
        %1128 = vmatprep.subr.mxu0 0.0
        %1129 = vmatpush1.msra.mxu0 0.0
        %1130 = vmatprep.subr.mxu0 0.0
        %1131 = vmatpush1.msra.mxu0 0.0
        %1132 = vmatprep.subr.mxu0 0.0
        %1133 = vmatpush1.msra.mxu0 0.0
        %1134 = vmatprep.subr.mxu0 0.0
        %1135 = vmatpush1.msra.mxu0 0.0
        %1136 = vmatprep.subr.mxu0 0.0
        %1137 = vmatpush1.msra.mxu0 0.0
        %1138 = vmatprep.subr.mxu0 0.0
        %1139 = vmatpush1.msra.mxu0 0.0
        %1140 = vmatprep.subr.mxu0 0.0
        %1141 = vmatpush1.msra.mxu0 0.0
        %1142 = vmatprep.subr.mxu0 0.0
        %1143 = vmatpush1.msra.mxu0 0.0
        %1144 = vmatprep.subr.mxu0 0.0
        %1145 = vmatpush1.msra.mxu0 0.0
        %1146 = vmatprep.subr.mxu0 0.0
        %1147 = vmatpush1.msra.mxu0 0.0
        %1148 = vmatprep.subr.mxu0 0.0
        %1149 = vmatpush1.msra.mxu0 0.0
        %1150 = vmatprep.subr.mxu0 0.0
        %1151 = vmatpush1.msra.mxu0 0.0
        %1152 = vmatprep.subr.mxu0 0.0
        %1153 = vmatpush1.msra.mxu0 0.0
        %1154 = vmatprep.subr.mxu0 0.0
        %1155 = vmatpush1.msra.mxu0 0.0
        %1156 = vmatprep.subr.mxu0 0.0
        %1157 = vmatpush1.msra.mxu0 0.0
        %1158 = vmatprep.mubr.f32.mxu0 0.0
        %1159 = vmatmul.mubr.f32.gmra.mrb[0].mxu0 %v1092
        %v1160 = vpop.f32.mrb[0].mxu0
        %v1161 = vadd.f32 %v1086, %v1160
        %v1162 = vpop.f32.mrb[0].mxu0
        %1163 = vdwg.mxu0
        %v1164 = vsel %vm645, %v999, 0.0
        %1165 = vadd.xlane.f32.xlu0 %v1164
        %v1166 = vpop.xlane.xlu0 %1165
        %v1167 = vmul.f32 %v999, %v999
        %v1168 = vsel %vm645, %v1167, 0.0
        %1169 = vadd.xlane.f32.xlu0 %v1168
        %v1170 = vpop.xlane.xlu0 %1169
        %v1172 = vsel %vm660, %v999, 0
        %1174 = vmatprep.subr.mxu0 0.0
        %1175 = vmatpush1.msra.mxu0 %v631
        %1176 = vmatprep.subr.mxu0 0.0
        %1177 = vmatpush1.msra.mxu0 %v632
        %1178 = vmatprep.subr.mxu0 0.0
        %1179 = vmatpush1.msra.mxu0 %v633
        %1180 = vmatprep.subr.mxu0 0.0
        %1181 = vmatpush1.msra.mxu0 %v634
        %1182 = vmatprep.subr.mxu0 0.0
        %1183 = vmatpush1.msra.mxu0 0.0
        %1184 = vmatprep.subr.mxu0 0.0
        %1185 = vmatpush1.msra.mxu0 0.0
        %1186 = vmatprep.subr.mxu0 0.0
        %1187 = vmatpush1.msra.mxu0 0.0
        %1188 = vmatprep.subr.mxu0 0.0
        %1189 = vmatpush1.msra.mxu0 0.0
        %1190 = vmatprep.subr.mxu0 0.0
        %1191 = vmatpush1.msra.mxu0 0.0
        %1192 = vmatprep.subr.mxu0 0.0
        %1193 = vmatpush1.msra.mxu0 0.0
        %1194 = vmatprep.subr.mxu0 0.0
        %1195 = vmatpush1.msra.mxu0 0.0
        %1196 = vmatprep.subr.mxu0 0.0
        %1197 = vmatpush1.msra.mxu0 0.0
        %1198 = vmatprep.subr.mxu0 0.0
        %1199 = vmatpush1.msra.mxu0 0.0
        %1200 = vmatprep.subr.mxu0 0.0
        %1201 = vmatpush1.msra.mxu0 0.0
        %1202 = vmatprep.subr.mxu0 0.0
        %1203 = vmatpush1.msra.mxu0 0.0
        %1204 = vmatprep.subr.mxu0 0.0
        %1205 = vmatpush1.msra.mxu0 0.0
        %1206 = vmatprep.subr.mxu0 0.0
        %1207 = vmatpush1.msra.mxu0 0.0
        %1208 = vmatprep.subr.mxu0 0.0
        %1209 = vmatpush1.msra.mxu0 0.0
        %1210 = vmatprep.subr.mxu0 0.0
        %1211 = vmatpush1.msra.mxu0 0.0
        %1212 = vmatprep.subr.mxu0 0.0
        %1213 = vmatpush1.msra.mxu0 0.0
        %1214 = vmatprep.subr.mxu0 0.0
        %1215 = vmatpush1.msra.mxu0 0.0
        %1216 = vmatprep.subr.mxu0 0.0
        %1217 = vmatpush1.msra.mxu0 0.0
        %1218 = vmatprep.subr.mxu0 0.0
        %1219 = vmatpush1.msra.mxu0 0.0
        %1220 = vmatprep.subr.mxu0 0.0
        %1221 = vmatpush1.msra.mxu0 0.0
        %1222 = vmatprep.subr.mxu0 0.0
        %1223 = vmatpush1.msra.mxu0 0.0
        %1224 = vmatprep.subr.mxu0 0.0
        %1225 = vmatpush1.msra.mxu0 0.0
        %1226 = vmatprep.subr.mxu0 0.0
        %1227 = vmatpush1.msra.mxu0 0.0
        %1228 = vmatprep.subr.mxu0 0.0
        %1229 = vmatpush1.msra.mxu0 0.0
        %1230 = vmatprep.subr.mxu0 0.0
        %1231 = vmatpush1.msra.mxu0 0.0
        %1232 = vmatprep.subr.mxu0 0.0
        %1233 = vmatpush1.msra.mxu0 0.0
        %1234 = vmatprep.subr.mxu0 0.0
        %1235 = vmatpush1.msra.mxu0 0.0
        %1236 = vmatprep.subr.mxu0 0.0
        %1237 = vmatpush1.msra.mxu0 0.0
        %1238 = vmatprep.mubr.f32.mxu0 0.0
        %1239 = vmatmul.mubr.f32.gmra.mrb[0].mxu0 %v1172
        %v1240 = vpop.f32.mrb[0].mxu0
        %v1241 = vadd.f32 0.0, %v1240
        %v1242 = vpop.f32.mrb[0].mxu0
        %1243 = vdwg.mxu0
        %v1244 = vadd.f32 %v1089, %v1166
        %v1245 = vadd.f32 %v1090, %v1170
        %v1246 = vadd.f32 %v1161, %v1241
        %v1247 = vsel %vm645, %v1001, 0.0
        %1248 = vadd.xlane.f32.xlu0 %v1247
        %v1249 = vpop.xlane.xlu0 %1248
        %v1250 = vmul.f32 %v1001, %v1001
        %v1251 = vsel %vm645, %v1250, 0.0
        %1252 = vadd.xlane.f32.xlu0 %v1251
        %v1253 = vpop.xlane.xlu0 %1252
        %v1255 = vsel %vm660, %v1001, 0
        %1257 = vmatprep.subr.mxu0 0.0
        %1258 = vmatpush1.msra.mxu0 %v635
        %1259 = vmatprep.subr.mxu0 0.0
        %1260 = vmatpush1.msra.mxu0 %v636
        %1261 = vmatprep.subr.mxu0 0.0
        %1262 = vmatpush1.msra.mxu0 %v637
        %1263 = vmatprep.subr.mxu0 0.0
        %1264 = vmatpush1.msra.mxu0 %v638
        %1265 = vmatprep.subr.mxu0 0.0
        %1266 = vmatpush1.msra.mxu0 0.0
        %1267 = vmatprep.subr.mxu0 0.0
        %1268 = vmatpush1.msra.mxu0 0.0
        %1269 = vmatprep.subr.mxu0 0.0
        %1270 = vmatpush1.msra.mxu0 0.0
        %1271 = vmatprep.subr.mxu0 0.0
        %1272 = vmatpush1.msra.mxu0 0.0
        %1273 = vmatprep.subr.mxu0 0.0
        %1274 = vmatpush1.msra.mxu0 0.0
        %1275 = vmatprep.subr.mxu0 0.0
        %1276 = vmatpush1.msra.mxu0 0.0
        %1277 = vmatprep.subr.mxu0 0.0
        %1278 = vmatpush1.msra.mxu0 0.0
        %1279 = vmatprep.subr.mxu0 0.0
        %1280 = vmatpush1.msra.mxu0 0.0
        %1281 = vmatprep.subr.mxu0 0.0
        %1282 = vmatpush1.msra.mxu0 0.0
        %1283 = vmatprep.subr.mxu0 0.0
        %1284 = vmatpush1.msra.mxu0 0.0
        %1285 = vmatprep.subr.mxu0 0.0
        %1286 = vmatpush1.msra.mxu0 0.0
        %1287 = vmatprep.subr.mxu0 0.0
        %1288 = vmatpush1.msra.mxu0 0.0
        %1289 = vmatprep.subr.mxu0 0.0
        %1290 = vmatpush1.msra.mxu0 0.0
        %1291 = vmatprep.subr.mxu0 0.0
        %1292 = vmatpush1.msra.mxu0 0.0
        %1293 = vmatprep.subr.mxu0 0.0
        %1294 = vmatpush1.msra.mxu0 0.0
        %1295 = vmatprep.subr.mxu0 0.0
        %1296 = vmatpush1.msra.mxu0 0.0
        %1297 = vmatprep.subr.mxu0 0.0
        %1298 = vmatpush1.msra.mxu0 0.0
        %1299 = vmatprep.subr.mxu0 0.0
        %1300 = vmatpush1.msra.mxu0 0.0
        %1301 = vmatprep.subr.mxu0 0.0
        %1302 = vmatpush1.msra.mxu0 0.0
        %1303 = vmatprep.subr.mxu0 0.0
        %1304 = vmatpush1.msra.mxu0 0.0
        %1305 = vmatprep.subr.mxu0 0.0
        %1306 = vmatpush1.msra.mxu0 0.0
        %1307 = vmatprep.subr.mxu0 0.0
        %1308 = vmatpush1.msra.mxu0 0.0
        %1309 = vmatprep.subr.mxu0 0.0
        %1310 = vmatpush1.msra.mxu0 0.0
        %1311 = vmatprep.subr.mxu0 0.0
        %1312 = vmatpush1.msra.mxu0 0.0
        %1313 = vmatprep.subr.mxu0 0.0
        %1314 = vmatpush1.msra.mxu0 0.0
        %1315 = vmatprep.subr.mxu0 0.0
        %1316 = vmatpush1.msra.mxu0 0.0
        %1317 = vmatprep.subr.mxu0 0.0
        %1318 = vmatpush1.msra.mxu0 0.0
        %1319 = vmatprep.subr.mxu0 0.0
        %1320 = vmatpush1.msra.mxu0 0.0
        %1321 = vmatprep.mubr.f32.mxu0 0.0
        %1322 = vmatmul.mubr.f32.gmra.mrb[0].mxu0 %v1255
        %v1323 = vpop.f32.mrb[0].mxu0
        %v1324 = vadd.f32 0.0, %v1323
        %v1325 = vpop.f32.mrb[0].mxu0
        %1326 = vdwg.mxu0
        %v1327 = vadd.f32 %v1244, %v1249
        %v1328 = vadd.f32 %v1245, %v1253
        %v1329 = vadd.f32 %v1246, %v1324
        %v1330 = vmul.f32 %v1327, 0.0078125
        %v1331 = vmul.f32 %v1328, 0.0078125
        %v1332 = vmul.f32 %v1330, %v1330
        %v1333 = vsub.f32 %v1331, %v1332
        %v1334 = vadd.f32 %v1333, 1e-05
        %v1335 = vrsqrt.pop %v1334
        %v1336 = vmul.f32 %v1330, %v984
        %v1337 = vsub.f32 %v1329, %v1336
        %v1338 = vmul.f32 %v1337, %v1335
        %v1339 = vadd.f32 %v1338, %v991
        %s1340 = scalar_lea.vmem %s621, 4
        %1341 = vst.msk [vmem:[%s1340] sm:$0x7] %vm645, %v1339
        %s1342 = scalar_lea.vmem %s531, 8 [#allocation2]
        %v1343 = vld [vmem:[%s1342] sm:$0x7]
        %s1344 = scalar_lea.vmem %s538, 8 [#allocation3]
        %v1345 = vld [vmem:[%s1344] sm:$0x7]
        %s1346 = scalar_lea.vmem %s545, 8 [#allocation4]
        %v1347 = vld [vmem:[%s1346] sm:$0x7]
        %s1348 = scalar_lea.vmem %s552, 8 [#allocation5]
        %v1349 = vld [vmem:[%s1348] sm:$0x7]
        %v1350 = vsel %vm645, %v1343, 0.0
        %1351 = vadd.xlane.f32.xlu0 %v1350
        %v1352 = vpop.xlane.xlu0 %1351
        %v1353 = vmul.f32 %v1343, %v1343
        %v1354 = vsel %vm645, %v1353, 0.0
        %1355 = vadd.xlane.f32.xlu0 %v1354
        %v1356 = vpop.xlane.xlu0 %1355
        %v1357 = vsel %vm645, %v1345, 0.0
        %1358 = vadd.xlane.f32.xlu0 %v1357
        %v1359 = vpop.xlane.xlu0 %1358
        %v1360 = vmul.f32 %v1345, %v1345
        %v1361 = vsel %vm645, %v1360, 0.0
        %1362 = vadd.xlane.f32.xlu0 %v1361
        %v1363 = vpop.xlane.xlu0 %1362
        %v1365 = vsel %vm660, %v1345, 0
        %1367 = vmatprep.subr.mxu0 0.0
        %1368 = vmatpush1.msra.mxu0 %v627
        %1369 = vmatprep.subr.mxu0 0.0
        %1370 = vmatpush1.msra.mxu0 %v628
        %1371 = vmatprep.subr.mxu0 0.0
        %1372 = vmatpush1.msra.mxu0 %v629
        %1373 = vmatprep.subr.mxu0 0.0
        %1374 = vmatpush1.msra.mxu0 %v630
        %1375 = vmatprep.subr.mxu0 0.0
        %1376 = vmatpush1.msra.mxu0 0.0
        %1377 = vmatprep.subr.mxu0 0.0
        %1378 = vmatpush1.msra.mxu0 0.0
        %1379 = vmatprep.subr.mxu0 0.0
        %1380 = vmatpush1.msra.mxu0 0.0
        %1381 = vmatprep.subr.mxu0 0.0
        %1382 = vmatpush1.msra.mxu0 0.0
        %1383 = vmatprep.subr.mxu0 0.0
        %1384 = vmatpush1.msra.mxu0 0.0
        %1385 = vmatprep.subr.mxu0 0.0
        %1386 = vmatpush1.msra.mxu0 0.0
        %1387 = vmatprep.subr.mxu0 0.0
        %1388 = vmatpush1.msra.mxu0 0.0
        %1389 = vmatprep.subr.mxu0 0.0
        %1390 = vmatpush1.msra.mxu0 0.0
        %1391 = vmatprep.subr.mxu0 0.0
        %1392 = vmatpush1.msra.mxu0 0.0
        %1393 = vmatprep.subr.mxu0 0.0
        %1394 = vmatpush1.msra.mxu0 0.0
        %1395 = vmatprep.subr.mxu0 0.0
        %1396 = vmatpush1.msra.mxu0 0.0
        %1397 = vmatprep.subr.mxu0 0.0
        %1398 = vmatpush1.msra.mxu0 0.0
        %1399 = vmatprep.subr.mxu0 0.0
        %1400 = vmatpush1.msra.mxu0 0.0
        %1401 = vmatprep.subr.mxu0 0.0
        %1402 = vmatpush1.msra.mxu0 0.0
        %1403 = vmatprep.subr.mxu0 0.0
        %1404 = vmatpush1.msra.mxu0 0.0
        %1405 = vmatprep.subr.mxu0 0.0
        %1406 = vmatpush1.msra.mxu0 0.0
        %1407 = vmatprep.subr.mxu0 0.0
        %1408 = vmatpush1.msra.mxu0 0.0
        %1409 = vmatprep.subr.mxu0 0.0
        %1410 = vmatpush1.msra.mxu0 0.0
        %1411 = vmatprep.subr.mxu0 0.0
        %1412 = vmatpush1.msra.mxu0 0.0
        %1413 = vmatprep.subr.mxu0 0.0
        %1414 = vmatpush1.msra.mxu0 0.0
        %1415 = vmatprep.subr.mxu0 0.0
        %1416 = vmatpush1.msra.mxu0 0.0
        %1417 = vmatprep.subr.mxu0 0.0
        %1418 = vmatpush1.msra.mxu0 0.0
        %1419 = vmatprep.subr.mxu0 0.0
        %1420 = vmatpush1.msra.mxu0 0.0
        %1421 = vmatprep.subr.mxu0 0.0
        %1422 = vmatpush1.msra.mxu0 0.0
        %1423 = vmatprep.subr.mxu0 0.0
        %1424 = vmatpush1.msra.mxu0 0.0
        %1425 = vmatprep.subr.mxu0 0.0
        %1426 = vmatpush1.msra.mxu0 0.0
        %1427 = vmatprep.subr.mxu0 0.0
        %1428 = vmatpush1.msra.mxu0 0.0
        %1429 = vmatprep.subr.mxu0 0.0
        %1430 = vmatpush1.msra.mxu0 0.0
        %1431 = vmatprep.mubr.f32.mxu0 0.0
        %1432 = vmatmul.mubr.f32.gmra.mrb[0].mxu0 %v1365
        %v1433 = vpop.f32.mrb[0].mxu0
        %v1434 = vadd.f32 0.0, %v1433
        %v1435 = vpop.f32.mrb[0].mxu0
        %1436 = vdwg.mxu0
        %v1437 = vadd.f32 %v1352, %v1359
        %v1438 = vadd.f32 %v1356, %v1363
        %v1440 = vsel %vm660, %v1343, 0
        %1442 = vmatprep.subr.mxu0 0.0
        %1443 = vmatpush1.msra.mxu0 %v623
        %1444 = vmatprep.subr.mxu0 0.0
        %1445 = vmatpush1.msra.mxu0 %v624
        %1446 = vmatprep.subr.mxu0 0.0
        %1447 = vmatpush1.msra.mxu0 %v625
        %1448 = vmatprep.subr.mxu0 0.0
        %1449 = vmatpush1.msra.mxu0 %v626
        %1450 = vmatprep.subr.mxu0 0.0
        %1451 = vmatpush1.msra.mxu0 0.0
        %1452 = vmatprep.subr.mxu0 0.0
        %1453 = vmatpush1.msra.mxu0 0.0
        %1454 = vmatprep.subr.mxu0 0.0
        %1455 = vmatpush1.msra.mxu0 0.0
        %1456 = vmatprep.subr.mxu0 0.0
        %1457 = vmatpush1.msra.mxu0 0.0
        %1458 = vmatprep.subr.mxu0 0.0
        %1459 = vmatpush1.msra.mxu0 0.0
        %1460 = vmatprep.subr.mxu0 0.0
        %1461 = vmatpush1.msra.mxu0 0.0
        %1462 = vmatprep.subr.mxu0 0.0
        %1463 = vmatpush1.msra.mxu0 0.0
        %1464 = vmatprep.subr.mxu0 0.0
        %1465 = vmatpush1.msra.mxu0 0.0
        %1466 = vmatprep.subr.mxu0 0.0
        %1467 = vmatpush1.msra.mxu0 0.0
        %1468 = vmatprep.subr.mxu0 0.0
        %1469 = vmatpush1.msra.mxu0 0.0
        %1470 = vmatprep.subr.mxu0 0.0
        %1471 = vmatpush1.msra.mxu0 0.0
        %1472 = vmatprep.subr.mxu0 0.0
        %1473 = vmatpush1.msra.mxu0 0.0
        %1474 = vmatprep.subr.mxu0 0.0
        %1475 = vmatpush1.msra.mxu0 0.0
        %1476 = vmatprep.subr.mxu0 0.0
        %1477 = vmatpush1.msra.mxu0 0.0
        %1478 = vmatprep.subr.mxu0 0.0
        %1479 = vmatpush1.msra.mxu0 0.0
        %1480 = vmatprep.subr.mxu0 0.0
        %1481 = vmatpush1.msra.mxu0 0.0
        %1482 = vmatprep.subr.mxu0 0.0
        %1483 = vmatpush1.msra.mxu0 0.0
        %1484 = vmatprep.subr.mxu0 0.0
        %1485 = vmatpush1.msra.mxu0 0.0
        %1486 = vmatprep.subr.mxu0 0.0
        %1487 = vmatpush1.msra.mxu0 0.0
        %1488 = vmatprep.subr.mxu0 0.0
        %1489 = vmatpush1.msra.mxu0 0.0
        %1490 = vmatprep.subr.mxu0 0.0
        %1491 = vmatpush1.msra.mxu0 0.0
        %1492 = vmatprep.subr.mxu0 0.0
        %1493 = vmatpush1.msra.mxu0 0.0
        %1494 = vmatprep.subr.mxu0 0.0
        %1495 = vmatpush1.msra.mxu0 0.0
        %1496 = vmatprep.subr.mxu0 0.0
        %1497 = vmatpush1.msra.mxu0 0.0
        %1498 = vmatprep.subr.mxu0 0.0
        %1499 = vmatpush1.msra.mxu0 0.0
        %1500 = vmatprep.subr.mxu0 0.0
        %1501 = vmatpush1.msra.mxu0 0.0
        %1502 = vmatprep.subr.mxu0 0.0
        %1503 = vmatpush1.msra.mxu0 0.0
        %1504 = vmatprep.subr.mxu0 0.0
        %1505 = vmatpush1.msra.mxu0 0.0
        %1506 = vmatprep.mubr.f32.mxu0 0.0
        %1507 = vmatmul.mubr.f32.gmra.mrb[0].mxu0 %v1440
        %v1508 = vpop.f32.mrb[0].mxu0
        %v1509 = vadd.f32 %v1434, %v1508
        %v1510 = vpop.f32.mrb[0].mxu0
        %1511 = vdwg.mxu0
        %v1512 = vsel %vm645, %v1347, 0.0
        %1513 = vadd.xlane.f32.xlu0 %v1512
        %v1514 = vpop.xlane.xlu0 %1513
        %v1515 = vmul.f32 %v1347, %v1347
        %v1516 = vsel %vm645, %v1515, 0.0
        %1517 = vadd.xlane.f32.xlu0 %v1516
        %v1518 = vpop.xlane.xlu0 %1517
        %v1520 = vsel %vm660, %v1347, 0
        %1522 = vmatprep.subr.mxu0 0.0
        %1523 = vmatpush1.msra.mxu0 %v631
        %1524 = vmatprep.subr.mxu0 0.0
        %1525 = vmatpush1.msra.mxu0 %v632
        %1526 = vmatprep.subr.mxu0 0.0
        %1527 = vmatpush1.msra.mxu0 %v633
        %1528 = vmatprep.subr.mxu0 0.0
        %1529 = vmatpush1.msra.mxu0 %v634
        %1530 = vmatprep.subr.mxu0 0.0
        %1531 = vmatpush1.msra.mxu0 0.0
        %1532 = vmatprep.subr.mxu0 0.0
        %1533 = vmatpush1.msra.mxu0 0.0
        %1534 = vmatprep.subr.mxu0 0.0
        %1535 = vmatpush1.msra.mxu0 0.0
        %1536 = vmatprep.subr.mxu0 0.0
        %1537 = vmatpush1.msra.mxu0 0.0
        %1538 = vmatprep.subr.mxu0 0.0
        %1539 = vmatpush1.msra.mxu0 0.0
        %1540 = vmatprep.subr.mxu0 0.0
        %1541 = vmatpush1.msra.mxu0 0.0
        %1542 = vmatprep.subr.mxu0 0.0
        %1543 = vmatpush1.msra.mxu0 0.0
        %1544 = vmatprep.subr.mxu0 0.0
        %1545 = vmatpush1.msra.mxu0 0.0
        %1546 = vmatprep.subr.mxu0 0.0
        %1547 = vmatpush1.msra.mxu0 0.0
        %1548 = vmatprep.subr.mxu0 0.0
        %1549 = vmatpush1.msra.mxu0 0.0
        %1550 = vmatprep.subr.mxu0 0.0
        %1551 = vmatpush1.msra.mxu0 0.0
        %1552 = vmatprep.subr.mxu0 0.0
        %1553 = vmatpush1.msra.mxu0 0.0
        %1554 = vmatprep.subr.mxu0 0.0
        %1555 = vmatpush1.msra.mxu0 0.0
        %1556 = vmatprep.subr.mxu0 0.0
        %1557 = vmatpush1.msra.mxu0 0.0
        %1558 = vmatprep.subr.mxu0 0.0
        %1559 = vmatpush1.msra.mxu0 0.0
        %1560 = vmatprep.subr.mxu0 0.0
        %1561 = vmatpush1.msra.mxu0 0.0
        %1562 = vmatprep.subr.mxu0 0.0
        %1563 = vmatpush1.msra.mxu0 0.0
        %1564 = vmatprep.subr.mxu0 0.0
        %1565 = vmatpush1.msra.mxu0 0.0
        %1566 = vmatprep.subr.mxu0 0.0
        %1567 = vmatpush1.msra.mxu0 0.0
        %1568 = vmatprep.subr.mxu0 0.0
        %1569 = vmatpush1.msra.mxu0 0.0
        %1570 = vmatprep.subr.mxu0 0.0
        %1571 = vmatpush1.msra.mxu0 0.0
        %1572 = vmatprep.subr.mxu0 0.0
        %1573 = vmatpush1.msra.mxu0 0.0
        %1574 = vmatprep.subr.mxu0 0.0
        %1575 = vmatpush1.msra.mxu0 0.0
        %1576 = vmatprep.subr.mxu0 0.0
        %1577 = vmatpush1.msra.mxu0 0.0
        %1578 = vmatprep.subr.mxu0 0.0
        %1579 = vmatpush1.msra.mxu0 0.0
        %1580 = vmatprep.subr.mxu0 0.0
        %1581 = vmatpush1.msra.mxu0 0.0
        %1582 = vmatprep.subr.mxu0 0.0
        %1583 = vmatpush1.msra.mxu0 0.0
        %1584 = vmatprep.subr.mxu0 0.0
        %1585 = vmatpush1.msra.mxu0 0.0
        %1586 = vmatprep.mubr.f32.mxu0 0.0
        %1587 = vmatmul.mubr.f32.gmra.mrb[0].mxu0 %v1520
        %v1588 = vpop.f32.mrb[0].mxu0
        %v1589 = vadd.f32 0.0, %v1588
        %v1590 = vpop.f32.mrb[0].mxu0
        %1591 = vdwg.mxu0
        %v1592 = vadd.f32 %v1437, %v1514
        %v1593 = vadd.f32 %v1438, %v1518
        %v1594 = vadd.f32 %v1509, %v1589
        %v1595 = vsel %vm645, %v1349, 0.0
        %1596 = vadd.xlane.f32.xlu0 %v1595
        %v1597 = vpop.xlane.xlu0 %1596
        %v1598 = vmul.f32 %v1349, %v1349
        %v1599 = vsel %vm645, %v1598, 0.0
        %1600 = vadd.xlane.f32.xlu0 %v1599
        %v1601 = vpop.xlane.xlu0 %1600
        %v1603 = vsel %vm660, %v1349, 0
        %1605 = vmatprep.subr.mxu0 0.0
        %1606 = vmatpush1.msra.mxu0 %v635
        %1607 = vmatprep.subr.mxu0 0.0
        %1608 = vmatpush1.msra.mxu0 %v636
        %1609 = vmatprep.subr.mxu0 0.0
        %1610 = vmatpush1.msra.mxu0 %v637
        %1611 = vmatprep.subr.mxu0 0.0
        %1612 = vmatpush1.msra.mxu0 %v638
        %1613 = vmatprep.subr.mxu0 0.0
        %1614 = vmatpush1.msra.mxu0 0.0
        %1615 = vmatprep.subr.mxu0 0.0
        %1616 = vmatpush1.msra.mxu0 0.0
        %1617 = vmatprep.subr.mxu0 0.0
        %1618 = vmatpush1.msra.mxu0 0.0
        %1619 = vmatprep.subr.mxu0 0.0
        %1620 = vmatpush1.msra.mxu0 0.0
        %1621 = vmatprep.subr.mxu0 0.0
        %1622 = vmatpush1.msra.mxu0 0.0
        %1623 = vmatprep.subr.mxu0 0.0
        %1624 = vmatpush1.msra.mxu0 0.0
        %1625 = vmatprep.subr.mxu0 0.0
        %1626 = vmatpush1.msra.mxu0 0.0
        %1627 = vmatprep.subr.mxu0 0.0
        %1628 = vmatpush1.msra.mxu0 0.0
        %1629 = vmatprep.subr.mxu0 0.0
        %1630 = vmatpush1.msra.mxu0 0.0
        %1631 = vmatprep.subr.mxu0 0.0
        %1632 = vmatpush1.msra.mxu0 0.0
        %1633 = vmatprep.subr.mxu0 0.0
        %1634 = vmatpush1.msra.mxu0 0.0
        %1635 = vmatprep.subr.mxu0 0.0
        %1636 = vmatpush1.msra.mxu0 0.0
        %1637 = vmatprep.subr.mxu0 0.0
        %1638 = vmatpush1.msra.mxu0 0.0
        %1639 = vmatprep.subr.mxu0 0.0
        %1640 = vmatpush1.msra.mxu0 0.0
        %1641 = vmatprep.subr.mxu0 0.0
        %1642 = vmatpush1.msra.mxu0 0.0
        %1643 = vmatprep.subr.mxu0 0.0
        %1644 = vmatpush1.msra.mxu0 0.0
        %1645 = vmatprep.subr.mxu0 0.0
        %1646 = vmatpush1.msra.mxu0 0.0
        %1647 = vmatprep.subr.mxu0 0.0
        %1648 = vmatpush1.msra.mxu0 0.0
        %1649 = vmatprep.subr.mxu0 0.0
        %1650 = vmatpush1.msra.mxu0 0.0
        %1651 = vmatprep.subr.mxu0 0.0
        %1652 = vmatpush1.msra.mxu0 0.0
        %1653 = vmatprep.subr.mxu0 0.0
        %1654 = vmatpush1.msra.mxu0 0.0
        %1655 = vmatprep.subr.mxu0 0.0
        %1656 = vmatpush1.msra.mxu0 0.0
        %1657 = vmatprep.subr.mxu0 0.0
        %1658 = vmatpush1.msra.mxu0 0.0
        %1659 = vmatprep.subr.mxu0 0.0
        %1660 = vmatpush1.msra.mxu0 0.0
        %1661 = vmatprep.subr.mxu0 0.0
        %1662 = vmatpush1.msra.mxu0 0.0
        %1663 = vmatprep.subr.mxu0 0.0
        %1664 = vmatpush1.msra.mxu0 0.0
        %1665 = vmatprep.subr.mxu0 0.0
        %1666 = vmatpush1.msra.mxu0 0.0
        %1667 = vmatprep.subr.mxu0 0.0
        %1668 = vmatpush1.msra.mxu0 0.0
        %1669 = vmatprep.mubr.f32.mxu0 0.0
        %1670 = vmatmul.mubr.f32.gmra.mrb[0].mxu0 %v1603
        %v1671 = vpop.f32.mrb[0].mxu0
        %v1672 = vadd.f32 0.0, %v1671
        %v1673 = vpop.f32.mrb[0].mxu0
        %1674 = vdwg.mxu0
        %v1675 = vadd.f32 %v1592, %v1597
        %v1676 = vadd.f32 %v1593, %v1601
        %v1677 = vadd.f32 %v1594, %v1672
        %v1678 = vmul.f32 %v1675, 0.0078125
        %v1679 = vmul.f32 %v1676, 0.0078125
        %v1680 = vmul.f32 %v1678, %v1678
        %v1681 = vsub.f32 %v1679, %v1680
        %v1682 = vadd.f32 %v1681, 1e-05
        %v1683 = vrsqrt.pop %v1682
        %v1684 = vmul.f32 %v1678, %v984
        %v1685 = vsub.f32 %v1677, %v1684
        %v1686 = vmul.f32 %v1685, %v1683
        %v1687 = vadd.f32 %v1686, %v991
        %s1688 = scalar_lea.vmem %s621, 8
        %1689 = vst.msk [vmem:[%s1688] sm:$0x7] %vm645, %v1687
        %s1690 = smul.u32 3, %s25
        %p1691 = scmp.lt.s32.totalorder %s23, 1
        %s1692 = scalar_select %p1691, %s23, 1
        %p1693 = scmp.lt.s32.totalorder %s24, 2
        %s1694 = scalar_select %p1693, %s24, 2
        %p1695 = scmp.lt.s32.totalorder %s1690, 2
        %s1696 = scalar_select %p1695, %s1690, 2
        %p1697 = scmp.lt.s32.totalorder %s26, 0
        %s1698 = scalar_select %p1697, %s26, 0
        %s1699 = sadd.s32 %s1698, %s1696
        %s1700 = smul.addr %s1694, 3
        %s1701 = sadd.s32 %s1699, %s1700
        %s1702 = smul.addr %s1692, 9
        %s1703 = sadd.s32 %s1701, %s1702
        %s1704 = smul.addr %s1703, 4
        %s1705 = scalar_lea.vmem %s6, %s1704
        // Predicated region
        $region209: #{patch_merging_v2.1} parent=191 // pred_check
          %p1706 = pneg %p237
        $region210: #{patch_merging_v2.1} parent=191 // pred_check_branch
          %1708 = sbr.rel (%p1706) target = $region212
        $region211: #{patch_merging_v2.1} parent=191 // pred_region
          %s1709 = smul.u32 3, %s25
        $region212: #{patch_merging_v2.1} parent=191 // pred_fallthru
          _
      $region192: #{patch_merging_v2.1} parent=5 // pred_fallthru
        _
      %p1710 = scmp.le.s32.totalorder 2, %s12
      // Predicated region
      $region213: #{patch_merging_v2.1} parent=5 // pred_check
        %p1711 = pneg %p1710
      $region214: #{patch_merging_v2.1} parent=5 // pred_check_branch
        %1713 = sbr.rel (%p1711) target = $region216
      $region215: #{patch_merging_v2.1} parent=5 // pred_region
        %s1714 = ssub.s32 %s12, 2
        // Predicated region
        $region217: #{patch_merging_v2.1} parent=215 // pred_check
          %p1715 = pneg %p243
        $region218: #{patch_merging_v2.1} parent=215 // pred_check_branch
          %1717 = sbr.rel (%p1715) target = $region220
        $region219: #{patch_merging_v2.1} parent=215 // pred_region
          %s1718 = smul.u32 3, %s29
          %p1719 = scmp.lt.s32.totalorder %s27, 1
          %s1720 = scalar_select %p1719, %s27, 1
          %p1721 = scmp.lt.s32.totalorder %s28, 2
          %s1722 = scalar_select %p1721, %s28, 2
          %p1723 = scmp.lt.s32.totalorder %s1718, 2
          %s1724 = scalar_select %p1723, %s1718, 2
          %p1725 = scmp.lt.s32.totalorder %s30, 0
          %s1726 = scalar_select %p1725, %s30, 0
          %s1727 = sadd.s32 %s1726, %s1724
          %s1728 = smul.addr %s1722, 3
          %s1729 = sadd.s32 %s1727, %s1728
          %s1730 = smul.addr %s1720, 9
          %s1731 = sadd.s32 %s1729, %s1730
          %s1732 = smul.addr %s1731, 4
          %s1733 = scalar_lea.vmem %s6, %s1732
        $region220: #{patch_merging_v2.1} parent=215 // pred_fallthru
          _
      $region216: #{patch_merging_v2.1} parent=5 // pred_fallthru
        _
    $region6: #{patch_merging_v2.1} parent=1 // loop_footer
      %s16 = sadd.s32 1, %s12
    $region7: #{patch_merging_v2.1} parent=1 // loop_footer_branch
      %11 = sbr.rel target = $region3
    $region8: #{patch_merging_v2.1} parent=1 // loop_exit
      _

</llo_original>
